<compile_context>
chip_gen: v6e
topology: v6e:2x2x1
jax: 0.10.0
libtpu: 0.0.40
codegen_flags: <defaults>
</compile_context>

<pallas_src>
import numpy as np
import jax
import jax.numpy as jnp
from jax.experimental import pallas as pl
from jax.experimental.pallas import tpu as pltpu


# --------------------------------------------------------------------------
# Parameter preprocessing (glue): fold the whole 3-D conv (all zero padding
# included) into a single matrix so the kernel does one matmul.
#
#   y[n, do*HW+ho*W+wo] = sum_{c,di,hi,wi} pooled[n, c, di, hi, wi]
#                                          * T[c*DHW + di*HW+hi*W+wi, out]
# Columns >= D*H*W (lane padding) are never written and stay exactly zero.
# --------------------------------------------------------------------------
def build_conv_matrix(conv_w, D, H, W, DHWP):
    conv_w = np.asarray(conv_w, dtype=np.float32)        # (1, 2, KS, KS, KS)
    KS = conv_w.shape[-1]
    PAD = (KS - 1) // 2
    HW = H * W
    DHW = D * HW
    T = np.zeros((2 * DHW, DHWP), np.float32)
    do, ho, wo = np.meshgrid(np.arange(D), np.arange(H), np.arange(W),
                             indexing="ij")
    out_idx = (do * HW + ho * W + wo).reshape(-1)
    for c in range(2):
        for kd in range(KS):
            for kh in range(KS):
                for kw in range(KS):
                    di = do + kd - PAD
                    hi = ho + kh - PAD
                    wi = wo + kw - PAD
                    valid = ((di >= 0) & (di < D) & (hi >= 0) & (hi < H) &
                             (wi >= 0) & (wi < W)).reshape(-1)
                    in_idx = (di * HW + hi * W + wi).reshape(-1)
                    T[c * DHW + in_idx[valid], out_idx[valid]] = \
                        conv_w[0, c, kd, kh, kw]
    return T


# --------------------------------------------------------------------------
# Pallas kernel + wrapper
# --------------------------------------------------------------------------
def spatial_gate_forward(x, conv_w, gamma, beta, *, eps=1e-5, batch_block=8):
    N, C, D, H, W = x.shape
    DHW = D * H * W
    DHWP = ((DHW + 127) // 128) * 128        # lane-dense matmul output width

    # bf16 MXU operand (accumulation stays f32 inside the kernel).
    T = jnp.asarray(build_conv_matrix(conv_w, D, H, W, DHWP),
                    dtype=jnp.bfloat16)                      # (2*DHW, DHWP)
    gb = jnp.array([gamma, beta], dtype=jnp.float32)         # SMEM scalars

    NB = min(N, batch_block)                 # samples per grid step
    Np = ((N + NB - 1) // NB) * NB
    x_flat = x.reshape(N, C, DHW)            # lane-dense view
    if Np != N:
        x_flat = jnp.pad(x_flat, ((0, Np - N), (0, 0), (0, 0)))

    inv_c = 1.0 / C
    inv_dhw = 1.0 / DHW

    def kernel(x_ref, t_ref, gb_ref, o_ref):
        # x_ref : (NB, C, DHW)   VMEM, lane-dense
        # t_ref : (2*DHW, DHWP)  VMEM, bf16 constant (pipeline-fetched once)
        # gb_ref: (2,)           SMEM  [gamma, beta]
        # o_ref : (NB, C, DHW)   VMEM, lane-dense
        xv = x_ref[...]

        # ---- ChannelPool: max & mean over C (sublane reduce, full lanes) ----
        pooled_max = jnp.max(xv, axis=1)                      # (NB, DHW)
        pooled_mean = jnp.sum(xv, axis=1) * inv_c             # (NB, DHW)
        lhs = jnp.concatenate([pooled_max, pooled_mean],
                              axis=-1).astype(jnp.bfloat16)   # (NB, 2*DHW)

        # ---- Conv3d(2->1, k=7, pad=3, no bias): ONE fused MXU contraction ---
        acc = jnp.dot(lhs, t_ref[...],
                      preferred_element_type=jnp.float32)     # (NB, DHWP) f32

        # ---- InstanceNorm3d(1, affine), biased variance, one-pass stats -----
        # Pad columns of T are exactly zero => pad columns of acc are zero, so
        # full-width sums divided by DHW equal the valid-column statistics.
        mean = jnp.sum(acc, axis=-1, keepdims=True) * inv_dhw
        msq = jnp.sum(acc * acc, axis=-1, keepdims=True) * inv_dhw
        var = msq - mean * mean
        normed = (acc - mean) * jax.lax.rsqrt(var + eps) * gb_ref[0] + gb_ref[1]
        scale = jax.nn.sigmoid(normed)                        # (NB, DHWP)
        if DHWP != DHW:
            scale = scale[:, :DHW]

        # ---- gate: one lane-dense broadcast multiply + store ----------------
        o_ref[...] = (xv * scale[:, None, :]).astype(o_ref.dtype)

    grid_spec = pltpu.PrefetchScalarGridSpec(
        num_scalar_prefetch=0,
        grid=(Np // NB,),
        in_specs=[
            pl.BlockSpec((NB, C, DHW), lambda n: (n, 0, 0)),
            pl.BlockSpec((2 * DHW, DHWP), lambda n: (0, 0)),  # constant T
            pl.BlockSpec(memory_space=pltpu.MemorySpace.SMEM),
        ],
        out_specs=pl.BlockSpec((NB, C, DHW), lambda n: (n, 0, 0)),
    )

    out_flat = pl.pallas_call(
        kernel,
        out_shape=jax.ShapeDtypeStruct((Np, C, DHW), x.dtype),
        grid_spec=grid_spec,
        compiler_params=pltpu.CompilerParams(
            # No cross-step state (T comes via a constant-index BlockSpec, no
            # scratch, no step-0 init), so the batch axis is fully parallel
            # and both TensorCores are usable on v7x.
            dimension_semantics=("parallel",),
        ),
    )(x_flat, T, gb)

    return out_flat[:N].reshape(N, C, D, H, W)


# --------------------------------------------------------------------------
# Pure-JAX reference (for correctness check)
# --------------------------------------------------------------------------
def reference(x, conv_w, gamma, beta, eps=1e-5):
    PAD = (conv_w.shape[-1] - 1) // 2
    pooled = jnp.concatenate(
        [jnp.max(x, axis=1, keepdims=True), jnp.mean(x, axis=1, keepdims=True)],
        axis=1)
    y = jax.lax.conv_general_dilated(
        pooled, conv_w, window_strides=(1, 1, 1),
        padding=[(PAD, PAD)] * 3,
        dimension_numbers=("NCDHW", "OIDHW", "NCDHW"),
        precision=jax.lax.Precision.HIGHEST)
    mean = jnp.mean(y, axis=(2, 3, 4), keepdims=True)
    var = jnp.mean((y - mean) ** 2, axis=(2, 3, 4), keepdims=True)
    normed = (y - mean) / jnp.sqrt(var + eps) * gamma + beta
    return x * jax.nn.sigmoid(normed)


if __name__ == "__main__":
    key = jax.random.PRNGKey(0)
    k1, k2 = jax.random.split(key)

    # Small NCDHW input consistent with the 3-D module.
    N, C, D, H, W = 2, 4, 8, 8, 8
    x = jax.random.normal(k1, (N, C, D, H, W), dtype=jnp.float32)

    # Deterministic synthetic parameters (Conv3d(2->1, k=7, bias=False);
    # InstanceNorm3d(1, affine=True) gamma/beta).
    conv_w = 0.05 * jax.random.normal(k2, (1, 2, 7, 7, 7), dtype=jnp.float32)
    gamma, beta = 1.3, 0.1

    out = spatial_gate_forward(x, conv_w, gamma, beta)
    out = jax.block_until_ready(out)

    ref = reference(x, conv_w, gamma, beta)
    err = float(jnp.max(jnp.abs(out - ref)))
    # bf16 MXU operands (per perf review) with f32 accumulation: tolerance is
    # relaxed vs. the pure-f32 path; the f32 reference is kept as ground truth.
    tol = 1e-2
    if not (bool(jnp.all(jnp.isfinite(out))) and err < tol):
        raise AssertionError(f"Pallas kernel mismatch vs reference: max|err|={err}")
    print("KERNEL_OK")
</pallas_src>

<mosaic_0001>
module attributes {stable_mosaic.version = 11 : i64} {
  func.func @kernel(%arg0: i32, %arg1: memref<2x4x512xf32, #tpu.memory_space<vmem>>, %arg2: memref<1024x512xbf16, #tpu.memory_space<vmem>>, %arg3: memref<2xf32, #tpu.memory_space<smem>>, %arg4: memref<2x4x512xf32, #tpu.memory_space<vmem>>) attributes {dimension_semantics = [#tpu.dimension_semantics<parallel>], iteration_bounds = array<i64: 1>, scalar_prefetch = 0 : i64, scratch_operands = 0 : i64, tpu.core_type = #tpu.core_type<tc>, window_params = [{transform_indices = @transform_0, window_bounds = array<i64: 2, 4, 512>}, {pipeline_mode = #tpu.pipeline_mode<synchronous>, transform_indices = @transform_1, window_bounds = array<i64: 1024, 512>}, {transform_indices = @transform_2, window_bounds = array<i64: 2>}, {transform_indices = @transform_3, window_bounds = array<i64: 2, 4, 512>}]} {
    %c0 = arith.constant 0 : index
    %c0_0 = arith.constant 0 : index
    %c0_1 = arith.constant 0 : index
    %0 = vector.load %arg1[%c0, %c0_0, %c0_1] : memref<2x4x512xf32, #tpu.memory_space<vmem>>, vector<2x4x512xf32>
    %cst = arith.constant dense<0xFF800000> : vector<2x512xf32>
    %1 = vector.multi_reduction <maximumf>, %0, %cst [1] : vector<2x4x512xf32> to vector<2x512xf32>
    %cst_2 = arith.constant dense<0.000000e+00> : vector<2x512xf32>
    %2 = vector.multi_reduction <add>, %0, %cst_2 [1] : vector<2x4x512xf32> to vector<2x512xf32>
    %cst_3 = arith.constant 2.500000e-01 : f32
    %3 = vector.broadcast %cst_3 : f32 to vector<2x512xf32>
    %4 = arith.mulf %2, %3 : vector<2x512xf32>
    %5 = tpu.concatenate %1, %4 in 1 : vector<2x512xf32>, vector<2x512xf32> -> vector<2x1024xf32>
    %6 = arith.truncf %5 : vector<2x1024xf32> to vector<2x1024xbf16>
    %c0_4 = arith.constant 0 : index
    %c0_5 = arith.constant 0 : index
    %7 = vector.load %arg2[%c0_4, %c0_5] : memref<1024x512xbf16, #tpu.memory_space<vmem>>, vector<1024x512xbf16>
    %cst_6 = arith.constant dense<0.000000e+00> : vector<2x512xf32>
    %8 = tpu.matmul %6, %7, %cst_6 {dimension_numbers = #tpu.dot_dimension_numbers<[1], [0], [0], [1], [0, 0, 1, 1], [], []>} : vector<2x1024xbf16>, vector<1024x512xbf16>, vector<2x512xf32> -> vector<2x512xf32>
    %cst_7 = arith.constant dense<0.000000e+00> : vector<2xf32>
    %9 = vector.multi_reduction <add>, %8, %cst_7 [1] : vector<2x512xf32> to vector<2xf32>
    %10 = vector.shape_cast %9 : vector<2xf32> to vector<2x1xf32>
    %cst_8 = arith.constant 0.001953125 : f32
    %11 = vector.broadcast %cst_8 : f32 to vector<2x1xf32>
    %12 = arith.mulf %10, %11 : vector<2x1xf32>
    %13 = arith.mulf %8, %8 : vector<2x512xf32>
    %cst_9 = arith.constant dense<0.000000e+00> : vector<2xf32>
    %14 = vector.multi_reduction <add>, %13, %cst_9 [1] : vector<2x512xf32> to vector<2xf32>
    %15 = vector.shape_cast %14 : vector<2xf32> to vector<2x1xf32>
    %cst_10 = arith.constant 0.001953125 : f32
    %16 = vector.broadcast %cst_10 : f32 to vector<2x1xf32>
    %17 = arith.mulf %15, %16 : vector<2x1xf32>
    %18 = arith.mulf %12, %12 : vector<2x1xf32>
    %19 = arith.subf %17, %18 : vector<2x1xf32>
    %20 = vector.broadcast %12 : vector<2x1xf32> to vector<2x512xf32>
    %21 = arith.subf %8, %20 : vector<2x512xf32>
    %cst_11 = arith.constant 9.99999974E-6 : f32
    %22 = vector.broadcast %cst_11 : f32 to vector<2x1xf32>
    %23 = arith.addf %19, %22 : vector<2x1xf32>
    %24 = math.rsqrt %23 : vector<2x1xf32>
    %25 = vector.broadcast %24 : vector<2x1xf32> to vector<2x512xf32>
    %26 = arith.mulf %21, %25 : vector<2x512xf32>
    %c0_12 = arith.constant 0 : index
    %27 = memref.load %arg3[%c0_12] : memref<2xf32, #tpu.memory_space<smem>>
    %28 = vector.broadcast %27 : f32 to vector<2x512xf32>
    %29 = arith.mulf %26, %28 : vector<2x512xf32>
    %c1 = arith.constant 1 : index
    %30 = memref.load %arg3[%c1] : memref<2xf32, #tpu.memory_space<smem>>
    %31 = vector.broadcast %30 : f32 to vector<2x512xf32>
    %32 = arith.addf %29, %31 : vector<2x512xf32>
    %33 = arith.negf %32 : vector<2x512xf32>
    %34 = math.exp %33 : vector<2x512xf32>
    %cst_13 = arith.constant 1.000000e+00 : f32
    %35 = vector.broadcast %cst_13 : f32 to vector<2x512xf32>
    %36 = arith.addf %35, %34 : vector<2x512xf32>
    %37 = arith.divf %35, %36 : vector<2x512xf32>
    %38 = vector.shape_cast %37 : vector<2x512xf32> to vector<2x1x512xf32>
    %39 = vector.broadcast %38 : vector<2x1x512xf32> to vector<2x4x512xf32>
    %40 = arith.mulf %0, %39 : vector<2x4x512xf32>
    %c0_14 = arith.constant 0 : index
    %c0_15 = arith.constant 0 : index
    %c0_16 = arith.constant 0 : index
    %41 = vector.load %arg4[%c0_14, %c0_15, %c0_16] : memref<2x4x512xf32, #tpu.memory_space<vmem>>, vector<2x4x512xf32>
    tpu.vector_store %arg4[%c0_14, %c0_15, %c0_16], %40 {strides = array<i32>} : memref<2x4x512xf32, #tpu.memory_space<vmem>>, vector<2x4x512xf32>,
    return
  }
  func.func @transform_0(%arg0: i32) -> (i32, i32, i32) {
    %c0_i32 = arith.constant 0 : i32
    %c0_i32_0 = arith.constant 0 : i32
    %c0_i32_1 = arith.constant 0 : i32
    return %arg0, %c0_i32, %c0_i32_0 : i32, i32, i32
  }
  func.func @transform_1(%arg0: i32) -> (i32, i32) {
    %c0_i32 = arith.constant 0 : i32
    %c0_i32_0 = arith.constant 0 : i32
    %c0_i32_1 = arith.constant 0 : i32
    return %c0_i32, %c0_i32_0 : i32, i32
  }
  func.func @transform_2(%arg0: i32) -> i32 {
    %c0_i32 = arith.constant 0 : i32
    %c0_i32_0 = arith.constant 0 : i32
    return %c0_i32 : i32
  }
  func.func @transform_3(%arg0: i32) -> (i32, i32, i32) {
    %c0_i32 = arith.constant 0 : i32
    %c0_i32_0 = arith.constant 0 : i32
    %c0_i32_1 = arith.constant 0 : i32
    return %arg0, %c0_i32, %c0_i32_0 : i32, i32, i32
  }
}

</mosaic_0001>

<llo_original>
// kernel: tpu_custom_call.1
$region0: #{tpu_custom_call.1}
  #allocation0 [shape = 'u32[]', space=smem, size = 0x4, offset = 0x4, fixed_abs, tag = 'smem constant byte address 0x4 - core index']
  #allocation1 [shape = 'u32[144,128]{1,0:T(1,128)}', space=vmem, size = 0x12000, scoped, tag = 'internal scratch']
  %s0 = inlined_call_operand.hbm [shape: f32[2,4,512], index: 0, kind: input, shape index: {}]
  %s1 = inlined_call_operand.hbm [shape: bf16[1024,512], index: 1, kind: input, shape index: {}]
  %s2 = inlined_call_operand.vmem [shape: f32[2], index: 2, kind: input, shape index: {}]
  %s3 = inlined_call_operand.hbm [shape: f32[2,4,512], index: 3, kind: output, shape index: {}]
  %s4 = sld [smem:[#allocation0]]
  $region34: #{tpu_custom_call.1} parent=0
    _
  %s6 = ssub.s32 1, %s4
  %s7 = scalar_select 0, %s6, %s4
  $region1: #{tpu_custom_call.1} parent=0
    #allocation2 [shape = 'u8[16384]{0}', space=vmem, size = 0x4000, scoped, tag = 'input window, operand 0, single buffered']
    #allocation3 [shape = 's32[1]{0}', space=sflag, size = 0x4, scoped, tag = 'scoped memory for tpu_custom_call.1']
    #allocation4 [shape = 's32[1]{0}', space=sflag, size = 0x4, scoped, tag = 'scoped memory for tpu_custom_call.1']
    #allocation5 [shape = 's32[1]{0}', space=sflag, size = 0x4, scoped, tag = 'scoped memory for tpu_custom_call.1']
    #allocation6 [shape = 'u8[1048576]{0}', space=vmem, size = 0x100000, scoped, tag = 'input window, operand 1, single buffered']
    #allocation7 [shape = 's32[1]{0}', space=sflag, size = 0x4, scoped, tag = 'scoped memory for tpu_custom_call.1']
    #allocation8 [shape = 'u8[512]{0}', space=smem, size = 0x200, scoped, tag = 'input window, operand 2, single buffered']
    #allocation9 [shape = 'u8[16384]{0}', space=vmem, size = 0x4000, scoped, tag = 'output window, operand 0, single buffered']
    %8 = vsyncpa [#allocation3], 0
    %9 = vsyncpa [#allocation7], 0
    %10 = vsyncpa [#allocation5], 0
    %11 = vsyncpa [#allocation4], 0
    // Predicated region
    $region2: #{tpu_custom_call.1} parent=1 // pred_check
      _
    $region3: #{tpu_custom_call.1} parent=1 // pred_check_branch
      %13 = sbr.rel (0) target = $region5
    $region4: #{tpu_custom_call.1} parent=1 // pred_region
      %s15 = ssub.s32 512, 512
      %16 = vsyncadd [#allocation3], %s15
      %s17 = sshll.u32 [#allocation2], 4
      %s18 = int_to_ptr.vmem [resolvable:$true] %s17
      %23 = dma.hbm_to_vmem [thread:$0]  %s0, 512, %s18, [#allocation3], 256, 256, 16
    $region5: #{tpu_custom_call.1} parent=1 // pred_fallthru
      _
    // Predicated region
    $region6: #{tpu_custom_call.1} parent=1 // pred_check
      _
    $region7: #{tpu_custom_call.1} parent=1 // pred_check_branch
      %25 = sbr.rel (0) target = $region9
    $region8: #{tpu_custom_call.1} parent=1 // pred_region
      %s27 = ssub.s32 32768, 32768
      %28 = vsyncadd [#allocation7], %s27
      %s29 = sshll.u32 [#allocation6], 4
      %s30 = int_to_ptr.vmem [resolvable:$true] %s29
      %35 = dma.hbm_to_vmem [thread:$0]  %s1, 32768, %s30, [#allocation7], 256, 256, 16
    $region9: #{tpu_custom_call.1} parent=1 // pred_fallthru
      _
    // Predicated region
    $region10: #{tpu_custom_call.1} parent=1 // pred_check
      _
    $region11: #{tpu_custom_call.1} parent=1 // pred_check_branch
      %37 = sbr.rel (0) target = $region13
    $region12: #{tpu_custom_call.1} parent=1 // pred_region
      %s39 = ssub.s32 16, 16
      %40 = vsyncadd [#allocation5], %s39
      %s42 = sshll.u32 %s2, 4
      %s43 = int_to_ptr.vmem [resolvable:$true] %s42
      %45 = dma.vmem_to_smem %s43, 16, [#allocation8], [#allocation5]
    $region13: #{tpu_custom_call.1} parent=1 // pred_fallthru
      _
    // Predicated region
    $region14: #{tpu_custom_call.1} parent=1 // pred_check
      _
    $region15: #{tpu_custom_call.1} parent=1 // pred_check_branch
      %47 = sbr.rel (0) target = $region17
    $region16: #{tpu_custom_call.1} parent=1 // pred_region
      %48 = dma.done [#allocation3], 512
    $region17: #{tpu_custom_call.1} parent=1 // pred_fallthru
      _
    // Predicated region
    $region18: #{tpu_custom_call.1} parent=1 // pred_check
      _
    $region19: #{tpu_custom_call.1} parent=1 // pred_check_branch
      %50 = sbr.rel (0) target = $region21
    $region20: #{tpu_custom_call.1} parent=1 // pred_region
      %51 = dma.done [#allocation7], 32768
    $region21: #{tpu_custom_call.1} parent=1 // pred_fallthru
      _
    // Predicated region
    $region22: #{tpu_custom_call.1} parent=1 // pred_check
      _
    $region23: #{tpu_custom_call.1} parent=1 // pred_check_branch
      %53 = sbr.rel (0) target = $region25
    $region24: #{tpu_custom_call.1} parent=1 // pred_region
      %54 = dma.done [#allocation5], 16
    $region25: #{tpu_custom_call.1} parent=1 // pred_fallthru
      _
    %55 = sfence
    %v56 = vld [vmem:[#allocation2] sm:$0xff]
    %v57 = vld [vmem:[#allocation2 + $0x8] sm:$0xff]
    %v58 = vld [vmem:[#allocation2 + $0x10] sm:$0xff]
    %v59 = vld [vmem:[#allocation2 + $0x18] sm:$0xff]
    %v64 = vcombine.high %v56, %v56
    %v65 = vcombine.high %v57, %v57
    %v66 = vcombine.high %v58, %v58
    %v67 = vcombine.high %v59, %v59
    %vm72 = vcmask 1043456
    %v73 = vsel %vm72, %v56, -inf
    %v74 = vrot.slane %v73, 4
    %v75 = vmax.f32 %v73, %v74
    %v76 = vrot.slane %v75, 2
    %v77 = vmax.f32 %v75, %v76
    %v78 = vrot.slane %v77, 1
    %v79 = vmax.f32 %v77, %v78
    %v80 = vsel %vm72, %v64, -inf
    %v81 = vrot.slane %v80, 4
    %v82 = vmax.f32 %v80, %v81
    %v83 = vrot.slane %v82, 2
    %v84 = vmax.f32 %v82, %v83
    %v85 = vrot.slane %v84, 1
    %v86 = vmax.f32 %v84, %v85
    %v87 = vsel %vm72, %v57, -inf
    %v88 = vrot.slane %v87, 4
    %v89 = vmax.f32 %v87, %v88
    %v90 = vrot.slane %v89, 2
    %v91 = vmax.f32 %v89, %v90
    %v92 = vrot.slane %v91, 1
    %v93 = vmax.f32 %v91, %v92
    %v94 = vsel %vm72, %v65, -inf
    %v95 = vrot.slane %v94, 4
    %v96 = vmax.f32 %v94, %v95
    %v97 = vrot.slane %v96, 2
    %v98 = vmax.f32 %v96, %v97
    %v99 = vrot.slane %v98, 1
    %v100 = vmax.f32 %v98, %v99
    %v101 = vsel %vm72, %v58, -inf
    %v102 = vrot.slane %v101, 4
    %v103 = vmax.f32 %v101, %v102
    %v104 = vrot.slane %v103, 2
    %v105 = vmax.f32 %v103, %v104
    %v106 = vrot.slane %v105, 1
    %v107 = vmax.f32 %v105, %v106
    %v108 = vsel %vm72, %v66, -inf
    %v109 = vrot.slane %v108, 4
    %v110 = vmax.f32 %v108, %v109
    %v111 = vrot.slane %v110, 2
    %v112 = vmax.f32 %v110, %v111
    %v113 = vrot.slane %v112, 1
    %v114 = vmax.f32 %v112, %v113
    %v115 = vsel %vm72, %v59, -inf
    %v116 = vrot.slane %v115, 4
    %v117 = vmax.f32 %v115, %v116
    %v118 = vrot.slane %v117, 2
    %v119 = vmax.f32 %v117, %v118
    %v120 = vrot.slane %v119, 1
    %v121 = vmax.f32 %v119, %v120
    %v122 = vsel %vm72, %v67, -inf
    %v123 = vrot.slane %v122, 4
    %v124 = vmax.f32 %v122, %v123
    %v125 = vrot.slane %v124, 2
    %v126 = vmax.f32 %v124, %v125
    %v127 = vrot.slane %v126, 1
    %v128 = vmax.f32 %v126, %v127
    %v129 = vsel %vm72, %v56, 0.0
    %v130 = vrot.slane %v129, 4
    %v131 = vadd.f32 %v129, %v130
    %v132 = vrot.slane %v131, 2
    %v133 = vadd.f32 %v131, %v132
    %v134 = vrot.slane %v133, 1
    %v135 = vadd.f32 %v133, %v134
    %v136 = vsel %vm72, %v64, 0.0
    %v137 = vrot.slane %v136, 4
    %v138 = vadd.f32 %v136, %v137
    %v139 = vrot.slane %v138, 2
    %v140 = vadd.f32 %v138, %v139
    %v141 = vrot.slane %v140, 1
    %v142 = vadd.f32 %v140, %v141
    %v143 = vsel %vm72, %v57, 0.0
    %v144 = vrot.slane %v143, 4
    %v145 = vadd.f32 %v143, %v144
    %v146 = vrot.slane %v145, 2
    %v147 = vadd.f32 %v145, %v146
    %v148 = vrot.slane %v147, 1
    %v149 = vadd.f32 %v147, %v148
    %v150 = vsel %vm72, %v65, 0.0
    %v151 = vrot.slane %v150, 4
    %v152 = vadd.f32 %v150, %v151
    %v153 = vrot.slane %v152, 2
    %v154 = vadd.f32 %v152, %v153
    %v155 = vrot.slane %v154, 1
    %v156 = vadd.f32 %v154, %v155
    %v157 = vsel %vm72, %v58, 0.0
    %v158 = vrot.slane %v157, 4
    %v159 = vadd.f32 %v157, %v158
    %v160 = vrot.slane %v159, 2
    %v161 = vadd.f32 %v159, %v160
    %v162 = vrot.slane %v161, 1
    %v163 = vadd.f32 %v161, %v162
    %v164 = vsel %vm72, %v66, 0.0
    %v165 = vrot.slane %v164, 4
    %v166 = vadd.f32 %v164, %v165
    %v167 = vrot.slane %v166, 2
    %v168 = vadd.f32 %v166, %v167
    %v169 = vrot.slane %v168, 1
    %v170 = vadd.f32 %v168, %v169
    %v171 = vsel %vm72, %v59, 0.0
    %v172 = vrot.slane %v171, 4
    %v173 = vadd.f32 %v171, %v172
    %v174 = vrot.slane %v173, 2
    %v175 = vadd.f32 %v173, %v174
    %v176 = vrot.slane %v175, 1
    %v177 = vadd.f32 %v175, %v176
    %v178 = vsel %vm72, %v67, 0.0
    %v179 = vrot.slane %v178, 4
    %v180 = vadd.f32 %v178, %v179
    %v181 = vrot.slane %v180, 2
    %v182 = vadd.f32 %v180, %v181
    %v183 = vrot.slane %v182, 1
    %v184 = vadd.f32 %v182, %v183
    %v185 = vmul.f32 %v135, 0.25
    %v186 = vmul.f32 %v142, 0.25
    %v187 = vmul.f32 %v149, 0.25
    %v188 = vmul.f32 %v156, 0.25
    %v189 = vmul.f32 %v163, 0.25
    %v190 = vmul.f32 %v170, 0.25
    %v191 = vmul.f32 %v177, 0.25
    %v192 = vmul.f32 %v184, 0.25
    %vm201 = vcmask 1041409
    %v202 = vsel %vm201, %v107, %v79
    %v203 = vsel %vm201, %v114, %v86
    %v204 = vsel %vm201, %v121, %v93
    %v205 = vsel %vm201, %v128, %v100
    %v218 = vsel %vm201, %v189, %v185
    %v219 = vsel %vm201, %v190, %v186
    %v220 = vsel %vm201, %v191, %v187
    %v221 = vsel %vm201, %v192, %v188
    %v226 = vpack.c.bf16 %v202, %v202
    %v227 = vpack.c.bf16 %v203, %v203
    %v228 = vpack.c.bf16 %v204, %v204
    %v229 = vpack.c.bf16 %v205, %v205
    %v230 = vpack.c.bf16 %v218, %v218
    %v231 = vpack.c.bf16 %v219, %v219
    %v232 = vpack.c.bf16 %v220, %v220
    %v233 = vpack.c.bf16 %v221, %v221
    %v234 = vld [vmem:[#allocation6] sm:$0xff]
    %v235 = vld [vmem:[#allocation6 + $0x8] sm:$0xff]
    %v236 = vld [vmem:[#allocation6 + $0x10] sm:$0xff]
    %v237 = vld [vmem:[#allocation6 + $0x18] sm:$0xff]
    %v238 = vld [vmem:[#allocation6 + $0x20] sm:$0xff]
    %v239 = vld [vmem:[#allocation6 + $0x28] sm:$0xff]
    %v240 = vld [vmem:[#allocation6 + $0x30] sm:$0xff]
    %v241 = vld [vmem:[#allocation6 + $0x38] sm:$0xff]
    %v242 = vld [vmem:[#allocation6 + $0x40] sm:$0xff]
    %v243 = vld [vmem:[#allocation6 + $0x48] sm:$0xff]
    %v244 = vld [vmem:[#allocation6 + $0x50] sm:$0xff]
    %v245 = vld [vmem:[#allocation6 + $0x58] sm:$0xff]
    %v246 = vld [vmem:[#allocation6 + $0x60] sm:$0xff]
    %v247 = vld [vmem:[#allocation6 + $0x68] sm:$0xff]
    %v248 = vld [vmem:[#allocation6 + $0x70] sm:$0xff]
    %v249 = vld [vmem:[#allocation6 + $0x78] sm:$0xff]
    %v250 = vld [vmem:[#allocation6 + $0x80] sm:$0xff]
    %v251 = vld [vmem:[#allocation6 + $0x88] sm:$0xff]
    %v252 = vld [vmem:[#allocation6 + $0x90] sm:$0xff]
    %v253 = vld [vmem:[#allocation6 + $0x98] sm:$0xff]
    %v254 = vld [vmem:[#allocation6 + $0xa0] sm:$0xff]
    %v255 = vld [vmem:[#allocation6 + $0xa8] sm:$0xff]
    %v256 = vld [vmem:[#allocation6 + $0xb0] sm:$0xff]
    %v257 = vld [vmem:[#allocation6 + $0xb8] sm:$0xff]
    %v258 = vld [vmem:[#allocation6 + $0xc0] sm:$0xff]
    %v259 = vld [vmem:[#allocation6 + $0xc8] sm:$0xff]
    %v260 = vld [vmem:[#allocation6 + $0xd0] sm:$0xff]
    %v261 = vld [vmem:[#allocation6 + $0xd8] sm:$0xff]
    %v262 = vld [vmem:[#allocation6 + $0xe0] sm:$0xff]
    %v263 = vld [vmem:[#allocation6 + $0xe8] sm:$0xff]
    %v264 = vld [vmem:[#allocation6 + $0xf0] sm:$0xff]
    %v265 = vld [vmem:[#allocation6 + $0xf8] sm:$0xff]
    %v266 = vld [vmem:[#allocation6 + $0x100] sm:$0xff]
    %v267 = vld [vmem:[#allocation6 + $0x108] sm:$0xff]
    %v268 = vld [vmem:[#allocation6 + $0x110] sm:$0xff]
    %v269 = vld [vmem:[#allocation6 + $0x118] sm:$0xff]
    %v270 = vld [vmem:[#allocation6 + $0x120] sm:$0xff]
    %v271 = vld [vmem:[#allocation6 + $0x128] sm:$0xff]
    %v272 = vld [vmem:[#allocation6 + $0x130] sm:$0xff]
    %v273 = vld [vmem:[#allocation6 + $0x138] sm:$0xff]
    %v274 = vld [vmem:[#allocation6 + $0x140] sm:$0xff]
    %v275 = vld [vmem:[#allocation6 + $0x148] sm:$0xff]
    %v276 = vld [vmem:[#allocation6 + $0x150] sm:$0xff]
    %v277 = vld [vmem:[#allocation6 + $0x158] sm:$0xff]
    %v278 = vld [vmem:[#allocation6 + $0x160] sm:$0xff]
    %v279 = vld [vmem:[#allocation6 + $0x168] sm:$0xff]
    %v280 = vld [vmem:[#allocation6 + $0x170] sm:$0xff]
    %v281 = vld [vmem:[#allocation6 + $0x178] sm:$0xff]
    %v282 = vld [vmem:[#allocation6 + $0x180] sm:$0xff]
    %v283 = vld [vmem:[#allocation6 + $0x188] sm:$0xff]
    %v284 = vld [vmem:[#allocation6 + $0x190] sm:$0xff]
    %v285 = vld [vmem:[#allocation6 + $0x198] sm:$0xff]
    %v286 = vld [vmem:[#allocation6 + $0x1a0] sm:$0xff]
    %v287 = vld [vmem:[#allocation6 + $0x1a8] sm:$0xff]
    %v288 = vld [vmem:[#allocation6 + $0x1b0] sm:$0xff]
    %v289 = vld [vmem:[#allocation6 + $0x1b8] sm:$0xff]
    %v290 = vld [vmem:[#allocation6 + $0x1c0] sm:$0xff]
    %v291 = vld [vmem:[#allocation6 + $0x1c8] sm:$0xff]
    %v292 = vld [vmem:[#allocation6 + $0x1d0] sm:$0xff]
    %v293 = vld [vmem:[#allocation6 + $0x1d8] sm:$0xff]
    %v294 = vld [vmem:[#allocation6 + $0x1e0] sm:$0xff]
    %v295 = vld [vmem:[#allocation6 + $0x1e8] sm:$0xff]
    %v296 = vld [vmem:[#allocation6 + $0x1f0] sm:$0xff]
    %v297 = vld [vmem:[#allocation6 + $0x1f8] sm:$0xff]
    %v298 = vld [vmem:[#allocation6 + $0x200] sm:$0xff]
    %v299 = vld [vmem:[#allocation6 + $0x208] sm:$0xff]
    %v300 = vld [vmem:[#allocation6 + $0x210] sm:$0xff]
    %v301 = vld [vmem:[#allocation6 + $0x218] sm:$0xff]
    %v302 = vld [vmem:[#allocation6 + $0x220] sm:$0xff]
    %v303 = vld [vmem:[#allocation6 + $0x228] sm:$0xff]
    %v304 = vld [vmem:[#allocation6 + $0x230] sm:$0xff]
    %v305 = vld [vmem:[#allocation6 + $0x238] sm:$0xff]
    %v306 = vld [vmem:[#allocation6 + $0x240] sm:$0xff]
    %v307 = vld [vmem:[#allocation6 + $0x248] sm:$0xff]
    %v308 = vld [vmem:[#allocation6 + $0x250] sm:$0xff]
    %v309 = vld [vmem:[#allocation6 + $0x258] sm:$0xff]
    %v310 = vld [vmem:[#allocation6 + $0x260] sm:$0xff]
    %v311 = vld [vmem:[#allocation6 + $0x268] sm:$0xff]
    %v312 = vld [vmem:[#allocation6 + $0x270] sm:$0xff]
    %v313 = vld [vmem:[#allocation6 + $0x278] sm:$0xff]
    %v314 = vld [vmem:[#allocation6 + $0x280] sm:$0xff]
    %v315 = vld [vmem:[#allocation6 + $0x288] sm:$0xff]
    %v316 = vld [vmem:[#allocation6 + $0x290] sm:$0xff]
    %v317 = vld [vmem:[#allocation6 + $0x298] sm:$0xff]
    %v318 = vld [vmem:[#allocation6 + $0x2a0] sm:$0xff]
    %v319 = vld [vmem:[#allocation6 + $0x2a8] sm:$0xff]
    %v320 = vld [vmem:[#allocation6 + $0x2b0] sm:$0xff]
    %v321 = vld [vmem:[#allocation6 + $0x2b8] sm:$0xff]
    %v322 = vld [vmem:[#allocation6 + $0x2c0] sm:$0xff]
    %v323 = vld [vmem:[#allocation6 + $0x2c8] sm:$0xff]
    %v324 = vld [vmem:[#allocation6 + $0x2d0] sm:$0xff]
    %v325 = vld [vmem:[#allocation6 + $0x2d8] sm:$0xff]
    %v326 = vld [vmem:[#allocation6 + $0x2e0] sm:$0xff]
    %v327 = vld [vmem:[#allocation6 + $0x2e8] sm:$0xff]
    %v328 = vld [vmem:[#allocation6 + $0x2f0] sm:$0xff]
    %v329 = vld [vmem:[#allocation6 + $0x2f8] sm:$0xff]
    %v330 = vld [vmem:[#allocation6 + $0x300] sm:$0xff]
    %v331 = vld [vmem:[#allocation6 + $0x308] sm:$0xff]
    %v332 = vld [vmem:[#allocation6 + $0x310] sm:$0xff]
    %v333 = vld [vmem:[#allocation6 + $0x318] sm:$0xff]
    %v334 = vld [vmem:[#allocation6 + $0x320] sm:$0xff]
    %v335 = vld [vmem:[#allocation6 + $0x328] sm:$0xff]
    %v336 = vld [vmem:[#allocation6 + $0x330] sm:$0xff]
    %v337 = vld [vmem:[#allocation6 + $0x338] sm:$0xff]
    %v338 = vld [vmem:[#allocation6 + $0x340] sm:$0xff]
    %v339 = vld [vmem:[#allocation6 + $0x348] sm:$0xff]
    %v340 = vld [vmem:[#allocation6 + $0x350] sm:$0xff]
    %v341 = vld [vmem:[#allocation6 + $0x358] sm:$0xff]
    %v342 = vld [vmem:[#allocation6 + $0x360] sm:$0xff]
    %v343 = vld [vmem:[#allocation6 + $0x368] sm:$0xff]
    %v344 = vld [vmem:[#allocation6 + $0x370] sm:$0xff]
    %v345 = vld [vmem:[#allocation6 + $0x378] sm:$0xff]
    %v346 = vld [vmem:[#allocation6 + $0x380] sm:$0xff]
    %v347 = vld [vmem:[#allocation6 + $0x388] sm:$0xff]
    %v348 = vld [vmem:[#allocation6 + $0x390] sm:$0xff]
    %v349 = vld [vmem:[#allocation6 + $0x398] sm:$0xff]
    %v350 = vld [vmem:[#allocation6 + $0x3a0] sm:$0xff]
    %v351 = vld [vmem:[#allocation6 + $0x3a8] sm:$0xff]
    %v352 = vld [vmem:[#allocation6 + $0x3b0] sm:$0xff]
    %v353 = vld [vmem:[#allocation6 + $0x3b8] sm:$0xff]
    %v354 = vld [vmem:[#allocation6 + $0x3c0] sm:$0xff]
    %v355 = vld [vmem:[#allocation6 + $0x3c8] sm:$0xff]
    %v356 = vld [vmem:[#allocation6 + $0x3d0] sm:$0xff]
    %v357 = vld [vmem:[#allocation6 + $0x3d8] sm:$0xff]
    %v358 = vld [vmem:[#allocation6 + $0x3e0] sm:$0xff]
    %v359 = vld [vmem:[#allocation6 + $0x3e8] sm:$0xff]
    %v360 = vld [vmem:[#allocation6 + $0x3f0] sm:$0xff]
    %v361 = vld [vmem:[#allocation6 + $0x3f8] sm:$0xff]
    %v362 = vld [vmem:[#allocation6 + $0x400] sm:$0xff]
    %v363 = vld [vmem:[#allocation6 + $0x408] sm:$0xff]
    %v364 = vld [vmem:[#allocation6 + $0x410] sm:$0xff]
    %v365 = vld [vmem:[#allocation6 + $0x418] sm:$0xff]
    %v366 = vld [vmem:[#allocation6 + $0x420] sm:$0xff]
    %v367 = vld [vmem:[#allocation6 + $0x428] sm:$0xff]
    %v368 = vld [vmem:[#allocation6 + $0x430] sm:$0xff]
    %v369 = vld [vmem:[#allocation6 + $0x438] sm:$0xff]
    %v370 = vld [vmem:[#allocation6 + $0x440] sm:$0xff]
    %v371 = vld [vmem:[#allocation6 + $0x448] sm:$0xff]
    %v372 = vld [vmem:[#allocation6 + $0x450] sm:$0xff]
    %v373 = vld [vmem:[#allocation6 + $0x458] sm:$0xff]
    %v374 = vld [vmem:[#allocation6 + $0x460] sm:$0xff]
    %v375 = vld [vmem:[#allocation6 + $0x468] sm:$0xff]
    %v376 = vld [vmem:[#allocation6 + $0x470] sm:$0xff]
    %v377 = vld [vmem:[#allocation6 + $0x478] sm:$0xff]
    %v378 = vld [vmem:[#allocation6 + $0x480] sm:$0xff]
    %v379 = vld [vmem:[#allocation6 + $0x488] sm:$0xff]
    %v380 = vld [vmem:[#allocation6 + $0x490] sm:$0xff]
    %v381 = vld [vmem:[#allocation6 + $0x498] sm:$0xff]
    %v382 = vld [vmem:[#allocation6 + $0x4a0] sm:$0xff]
    %v383 = vld [vmem:[#allocation6 + $0x4a8] sm:$0xff]
    %v384 = vld [vmem:[#allocation6 + $0x4b0] sm:$0xff]
    %v385 = vld [vmem:[#allocation6 + $0x4b8] sm:$0xff]
    %v386 = vld [vmem:[#allocation6 + $0x4c0] sm:$0xff]
    %v387 = vld [vmem:[#allocation6 + $0x4c8] sm:$0xff]
    %v388 = vld [vmem:[#allocation6 + $0x4d0] sm:$0xff]
    %v389 = vld [vmem:[#allocation6 + $0x4d8] sm:$0xff]
    %v390 = vld [vmem:[#allocation6 + $0x4e0] sm:$0xff]
    %v391 = vld [vmem:[#allocation6 + $0x4e8] sm:$0xff]
    %v392 = vld [vmem:[#allocation6 + $0x4f0] sm:$0xff]
    %v393 = vld [vmem:[#allocation6 + $0x4f8] sm:$0xff]
    %v394 = vld [vmem:[#allocation6 + $0x500] sm:$0xff]
    %v395 = vld [vmem:[#allocation6 + $0x508] sm:$0xff]
    %v396 = vld [vmem:[#allocation6 + $0x510] sm:$0xff]
    %v397 = vld [vmem:[#allocation6 + $0x518] sm:$0xff]
    %v398 = vld [vmem:[#allocation6 + $0x520] sm:$0xff]
    %v399 = vld [vmem:[#allocation6 + $0x528] sm:$0xff]
    %v400 = vld [vmem:[#allocation6 + $0x530] sm:$0xff]
    %v401 = vld [vmem:[#allocation6 + $0x538] sm:$0xff]
    %v402 = vld [vmem:[#allocation6 + $0x540] sm:$0xff]
    %v403 = vld [vmem:[#allocation6 + $0x548] sm:$0xff]
    %v404 = vld [vmem:[#allocation6 + $0x550] sm:$0xff]
    %v405 = vld [vmem:[#allocation6 + $0x558] sm:$0xff]
    %v406 = vld [vmem:[#allocation6 + $0x560] sm:$0xff]
    %v407 = vld [vmem:[#allocation6 + $0x568] sm:$0xff]
    %v408 = vld [vmem:[#allocation6 + $0x570] sm:$0xff]
    %v409 = vld [vmem:[#allocation6 + $0x578] sm:$0xff]
    %v410 = vld [vmem:[#allocation6 + $0x580] sm:$0xff]
    %v411 = vld [vmem:[#allocation6 + $0x588] sm:$0xff]
    %v412 = vld [vmem:[#allocation6 + $0x590] sm:$0xff]
    %v413 = vld [vmem:[#allocation6 + $0x598] sm:$0xff]
    %v414 = vld [vmem:[#allocation6 + $0x5a0] sm:$0xff]
    %v415 = vld [vmem:[#allocation6 + $0x5a8] sm:$0xff]
    %v416 = vld [vmem:[#allocation6 + $0x5b0] sm:$0xff]
    %v417 = vld [vmem:[#allocation6 + $0x5b8] sm:$0xff]
    %v418 = vld [vmem:[#allocation6 + $0x5c0] sm:$0xff]
    %v419 = vld [vmem:[#allocation6 + $0x5c8] sm:$0xff]
    %v420 = vld [vmem:[#allocation6 + $0x5d0] sm:$0xff]
    %v421 = vld [vmem:[#allocation6 + $0x5d8] sm:$0xff]
    %v422 = vld [vmem:[#allocation6 + $0x5e0] sm:$0xff]
    %v423 = vld [vmem:[#allocation6 + $0x5e8] sm:$0xff]
    %v424 = vld [vmem:[#allocation6 + $0x5f0] sm:$0xff]
    %v425 = vld [vmem:[#allocation6 + $0x5f8] sm:$0xff]
    %v426 = vld [vmem:[#allocation6 + $0x600] sm:$0xff]
    %v427 = vld [vmem:[#allocation6 + $0x608] sm:$0xff]
    %v428 = vld [vmem:[#allocation6 + $0x610] sm:$0xff]
    %v429 = vld [vmem:[#allocation6 + $0x618] sm:$0xff]
    %v430 = vld [vmem:[#allocation6 + $0x620] sm:$0xff]
    %v431 = vld [vmem:[#allocation6 + $0x628] sm:$0xff]
    %v432 = vld [vmem:[#allocation6 + $0x630] sm:$0xff]
    %v433 = vld [vmem:[#allocation6 + $0x638] sm:$0xff]
    %v434 = vld [vmem:[#allocation6 + $0x640] sm:$0xff]
    %v435 = vld [vmem:[#allocation6 + $0x648] sm:$0xff]
    %v436 = vld [vmem:[#allocation6 + $0x650] sm:$0xff]
    %v437 = vld [vmem:[#allocation6 + $0x658] sm:$0xff]
    %v438 = vld [vmem:[#allocation6 + $0x660] sm:$0xff]
    %v439 = vld [vmem:[#allocation6 + $0x668] sm:$0xff]
    %v440 = vld [vmem:[#allocation6 + $0x670] sm:$0xff]
    %v441 = vld [vmem:[#allocation6 + $0x678] sm:$0xff]
    %v442 = vld [vmem:[#allocation6 + $0x680] sm:$0xff]
    %v443 = vld [vmem:[#allocation6 + $0x688] sm:$0xff]
    %v444 = vld [vmem:[#allocation6 + $0x690] sm:$0xff]
    %v445 = vld [vmem:[#allocation6 + $0x698] sm:$0xff]
    %v446 = vld [vmem:[#allocation6 + $0x6a0] sm:$0xff]
    %v447 = vld [vmem:[#allocation6 + $0x6a8] sm:$0xff]
    %v448 = vld [vmem:[#allocation6 + $0x6b0] sm:$0xff]
    %v449 = vld [vmem:[#allocation6 + $0x6b8] sm:$0xff]
    %v450 = vld [vmem:[#allocation6 + $0x6c0] sm:$0xff]
    %v451 = vld [vmem:[#allocation6 + $0x6c8] sm:$0xff]
    %v452 = vld [vmem:[#allocation6 + $0x6d0] sm:$0xff]
    %v453 = vld [vmem:[#allocation6 + $0x6d8] sm:$0xff]
    %v454 = vld [vmem:[#allocation6 + $0x6e0] sm:$0xff]
    %v455 = vld [vmem:[#allocation6 + $0x6e8] sm:$0xff]
    %v456 = vld [vmem:[#allocation6 + $0x6f0] sm:$0xff]
    %v457 = vld [vmem:[#allocation6 + $0x6f8] sm:$0xff]
    %v458 = vld [vmem:[#allocation6 + $0x700] sm:$0xff]
    %v459 = vld [vmem:[#allocation6 + $0x708] sm:$0xff]
    %v460 = vld [vmem:[#allocation6 + $0x710] sm:$0xff]
    %v461 = vld [vmem:[#allocation6 + $0x718] sm:$0xff]
    %v462 = vld [vmem:[#allocation6 + $0x720] sm:$0xff]
    %v463 = vld [vmem:[#allocation6 + $0x728] sm:$0xff]
    %v464 = vld [vmem:[#allocation6 + $0x730] sm:$0xff]
    %v465 = vld [vmem:[#allocation6 + $0x738] sm:$0xff]
    %v466 = vld [vmem:[#allocation6 + $0x740] sm:$0xff]
    %v467 = vld [vmem:[#allocation6 + $0x748] sm:$0xff]
    %v468 = vld [vmem:[#allocation6 + $0x750] sm:$0xff]
    %v469 = vld [vmem:[#allocation6 + $0x758] sm:$0xff]
    %v470 = vld [vmem:[#allocation6 + $0x760] sm:$0xff]
    %v471 = vld [vmem:[#allocation6 + $0x768] sm:$0xff]
    %v472 = vld [vmem:[#allocation6 + $0x770] sm:$0xff]
    %v473 = vld [vmem:[#allocation6 + $0x778] sm:$0xff]
    %v474 = vld [vmem:[#allocation6 + $0x780] sm:$0xff]
    %v475 = vld [vmem:[#allocation6 + $0x788] sm:$0xff]
    %v476 = vld [vmem:[#allocation6 + $0x790] sm:$0xff]
    %v477 = vld [vmem:[#allocation6 + $0x798] sm:$0xff]
    %v478 = vld [vmem:[#allocation6 + $0x7a0] sm:$0xff]
    %v479 = vld [vmem:[#allocation6 + $0x7a8] sm:$0xff]
    %v480 = vld [vmem:[#allocation6 + $0x7b0] sm:$0xff]
    %v481 = vld [vmem:[#allocation6 + $0x7b8] sm:$0xff]
    %v482 = vld [vmem:[#allocation6 + $0x7c0] sm:$0xff]
    %v483 = vld [vmem:[#allocation6 + $0x7c8] sm:$0xff]
    %v484 = vld [vmem:[#allocation6 + $0x7d0] sm:$0xff]
    %v485 = vld [vmem:[#allocation6 + $0x7d8] sm:$0xff]
    %v486 = vld [vmem:[#allocation6 + $0x7e0] sm:$0xff]
    %v487 = vld [vmem:[#allocation6 + $0x7e8] sm:$0xff]
    %v488 = vld [vmem:[#allocation6 + $0x7f0] sm:$0xff]
    %v489 = vld [vmem:[#allocation6 + $0x7f8] sm:$0xff]
    %v746 = vunpack.c.l.b16 %v234
    %v747 = vunpack.c.h.b16 %v234
    %v748 = vunpack.c.l.b16 %v235
    %v749 = vunpack.c.h.b16 %v235
    %v750 = vunpack.c.l.b16 %v236
    %v751 = vunpack.c.h.b16 %v236
    %v752 = vunpack.c.l.b16 %v237
    %v753 = vunpack.c.h.b16 %v237
    %v754 = vunpack.c.l.b16 %v238
    %v755 = vunpack.c.h.b16 %v238
    %v756 = vunpack.c.l.b16 %v239
    %v757 = vunpack.c.h.b16 %v239
    %v758 = vunpack.c.l.b16 %v240
    %v759 = vunpack.c.h.b16 %v240
    %v760 = vunpack.c.l.b16 %v241
    %v761 = vunpack.c.h.b16 %v241
    %v762 = vunpack.c.l.b16 %v242
    %v763 = vunpack.c.h.b16 %v242
    %v764 = vunpack.c.l.b16 %v243
    %v765 = vunpack.c.h.b16 %v243
    %v766 = vunpack.c.l.b16 %v244
    %v767 = vunpack.c.h.b16 %v244
    %v768 = vunpack.c.l.b16 %v245
    %v769 = vunpack.c.h.b16 %v245
    %v770 = vunpack.c.l.b16 %v246
    %v771 = vunpack.c.h.b16 %v246
    %v772 = vunpack.c.l.b16 %v247
    %v773 = vunpack.c.h.b16 %v247
    %v774 = vunpack.c.l.b16 %v248
    %v775 = vunpack.c.h.b16 %v248
    %v776 = vunpack.c.l.b16 %v249
    %v777 = vunpack.c.h.b16 %v249
    %v778 = vunpack.c.l.b16 %v250
    %v779 = vunpack.c.h.b16 %v250
    %v780 = vunpack.c.l.b16 %v251
    %v781 = vunpack.c.h.b16 %v251
    %v782 = vunpack.c.l.b16 %v252
    %v783 = vunpack.c.h.b16 %v252
    %v784 = vunpack.c.l.b16 %v253
    %v785 = vunpack.c.h.b16 %v253
    %v786 = vunpack.c.l.b16 %v254
    %v787 = vunpack.c.h.b16 %v254
    %v788 = vunpack.c.l.b16 %v255
    %v789 = vunpack.c.h.b16 %v255
    %v790 = vunpack.c.l.b16 %v256
    %v791 = vunpack.c.h.b16 %v256
    %v792 = vunpack.c.l.b16 %v257
    %v793 = vunpack.c.h.b16 %v257
    %v794 = vunpack.c.l.b16 %v258
    %v795 = vunpack.c.h.b16 %v258
    %v796 = vunpack.c.l.b16 %v259
    %v797 = vunpack.c.h.b16 %v259
    %v798 = vunpack.c.l.b16 %v260
    %v799 = vunpack.c.h.b16 %v260
    %v800 = vunpack.c.l.b16 %v261
    %v801 = vunpack.c.h.b16 %v261
    %v802 = vunpack.c.l.b16 %v262
    %v803 = vunpack.c.h.b16 %v262
    %v804 = vunpack.c.l.b16 %v263
    %v805 = vunpack.c.h.b16 %v263
    %v806 = vunpack.c.l.b16 %v264
    %v807 = vunpack.c.h.b16 %v264
    %v808 = vunpack.c.l.b16 %v265
    %v809 = vunpack.c.h.b16 %v265
    %v810 = vunpack.c.l.b16 %v266
    %v811 = vunpack.c.h.b16 %v266
    %v812 = vunpack.c.l.b16 %v267
    %v813 = vunpack.c.h.b16 %v267
    %v814 = vunpack.c.l.b16 %v268
    %v815 = vunpack.c.h.b16 %v268
    %v816 = vunpack.c.l.b16 %v269
    %v817 = vunpack.c.h.b16 %v269
    %v818 = vunpack.c.l.b16 %v270
    %v819 = vunpack.c.h.b16 %v270
    %v820 = vunpack.c.l.b16 %v271
    %v821 = vunpack.c.h.b16 %v271
    %v822 = vunpack.c.l.b16 %v272
    %v823 = vunpack.c.h.b16 %v272
    %v824 = vunpack.c.l.b16 %v273
    %v825 = vunpack.c.h.b16 %v273
    %v826 = vunpack.c.l.b16 %v274
    %v827 = vunpack.c.h.b16 %v274
    %v828 = vunpack.c.l.b16 %v275
    %v829 = vunpack.c.h.b16 %v275
    %v830 = vunpack.c.l.b16 %v276
    %v831 = vunpack.c.h.b16 %v276
    %v832 = vunpack.c.l.b16 %v277
    %v833 = vunpack.c.h.b16 %v277
    %v834 = vunpack.c.l.b16 %v278
    %v835 = vunpack.c.h.b16 %v278
    %v836 = vunpack.c.l.b16 %v279
    %v837 = vunpack.c.h.b16 %v279
    %v838 = vunpack.c.l.b16 %v280
    %v839 = vunpack.c.h.b16 %v280
    %v840 = vunpack.c.l.b16 %v281
    %v841 = vunpack.c.h.b16 %v281
    %v842 = vunpack.c.l.b16 %v282
    %v843 = vunpack.c.h.b16 %v282
    %v844 = vunpack.c.l.b16 %v283
    %v845 = vunpack.c.h.b16 %v283
    %v846 = vunpack.c.l.b16 %v284
    %v847 = vunpack.c.h.b16 %v284
    %v848 = vunpack.c.l.b16 %v285
    %v849 = vunpack.c.h.b16 %v285
    %v850 = vunpack.c.l.b16 %v286
    %v851 = vunpack.c.h.b16 %v286
    %v852 = vunpack.c.l.b16 %v287
    %v853 = vunpack.c.h.b16 %v287
    %v854 = vunpack.c.l.b16 %v288
    %v855 = vunpack.c.h.b16 %v288
    %v856 = vunpack.c.l.b16 %v289
    %v857 = vunpack.c.h.b16 %v289
    %v858 = vunpack.c.l.b16 %v290
    %v859 = vunpack.c.h.b16 %v290
    %v860 = vunpack.c.l.b16 %v291
    %v861 = vunpack.c.h.b16 %v291
    %v862 = vunpack.c.l.b16 %v292
    %v863 = vunpack.c.h.b16 %v292
    %v864 = vunpack.c.l.b16 %v293
    %v865 = vunpack.c.h.b16 %v293
    %v866 = vunpack.c.l.b16 %v294
    %v867 = vunpack.c.h.b16 %v294
    %v868 = vunpack.c.l.b16 %v295
    %v869 = vunpack.c.h.b16 %v295
    %v870 = vunpack.c.l.b16 %v296
    %v871 = vunpack.c.h.b16 %v296
    %v872 = vunpack.c.l.b16 %v297
    %v873 = vunpack.c.h.b16 %v297
    %v874 = vunpack.c.l.b16 %v298
    %v875 = vunpack.c.h.b16 %v298
    %v876 = vunpack.c.l.b16 %v299
    %v877 = vunpack.c.h.b16 %v299
    %v878 = vunpack.c.l.b16 %v300
    %v879 = vunpack.c.h.b16 %v300
    %v880 = vunpack.c.l.b16 %v301
    %v881 = vunpack.c.h.b16 %v301
    %v882 = vunpack.c.l.b16 %v302
    %v883 = vunpack.c.h.b16 %v302
    %v884 = vunpack.c.l.b16 %v303
    %v885 = vunpack.c.h.b16 %v303
    %v886 = vunpack.c.l.b16 %v304
    %v887 = vunpack.c.h.b16 %v304
    %v888 = vunpack.c.l.b16 %v305
    %v889 = vunpack.c.h.b16 %v305
    %v890 = vunpack.c.l.b16 %v306
    %v891 = vunpack.c.h.b16 %v306
    %v892 = vunpack.c.l.b16 %v307
    %v893 = vunpack.c.h.b16 %v307
    %v894 = vunpack.c.l.b16 %v308
    %v895 = vunpack.c.h.b16 %v308
    %v896 = vunpack.c.l.b16 %v309
    %v897 = vunpack.c.h.b16 %v309
    %v898 = vunpack.c.l.b16 %v310
    %v899 = vunpack.c.h.b16 %v310
    %v900 = vunpack.c.l.b16 %v311
    %v901 = vunpack.c.h.b16 %v311
    %v902 = vunpack.c.l.b16 %v312
    %v903 = vunpack.c.h.b16 %v312
    %v904 = vunpack.c.l.b16 %v313
    %v905 = vunpack.c.h.b16 %v313
    %v906 = vunpack.c.l.b16 %v314
    %v907 = vunpack.c.h.b16 %v314
    %v908 = vunpack.c.l.b16 %v315
    %v909 = vunpack.c.h.b16 %v315
    %v910 = vunpack.c.l.b16 %v316
    %v911 = vunpack.c.h.b16 %v316
    %v912 = vunpack.c.l.b16 %v317
    %v913 = vunpack.c.h.b16 %v317
    %v914 = vunpack.c.l.b16 %v318
    %v915 = vunpack.c.h.b16 %v318
    %v916 = vunpack.c.l.b16 %v319
    %v917 = vunpack.c.h.b16 %v319
    %v918 = vunpack.c.l.b16 %v320
    %v919 = vunpack.c.h.b16 %v320
    %v920 = vunpack.c.l.b16 %v321
    %v921 = vunpack.c.h.b16 %v321
    %v922 = vunpack.c.l.b16 %v322
    %v923 = vunpack.c.h.b16 %v322
    %v924 = vunpack.c.l.b16 %v323
    %v925 = vunpack.c.h.b16 %v323
    %v926 = vunpack.c.l.b16 %v324
    %v927 = vunpack.c.h.b16 %v324
    %v928 = vunpack.c.l.b16 %v325
    %v929 = vunpack.c.h.b16 %v325
    %v930 = vunpack.c.l.b16 %v326
    %v931 = vunpack.c.h.b16 %v326
    %v932 = vunpack.c.l.b16 %v327
    %v933 = vunpack.c.h.b16 %v327
    %v934 = vunpack.c.l.b16 %v328
    %v935 = vunpack.c.h.b16 %v328
    %v936 = vunpack.c.l.b16 %v329
    %v937 = vunpack.c.h.b16 %v329
    %v938 = vunpack.c.l.b16 %v330
    %v939 = vunpack.c.h.b16 %v330
    %v940 = vunpack.c.l.b16 %v331
    %v941 = vunpack.c.h.b16 %v331
    %v942 = vunpack.c.l.b16 %v332
    %v943 = vunpack.c.h.b16 %v332
    %v944 = vunpack.c.l.b16 %v333
    %v945 = vunpack.c.h.b16 %v333
    %v946 = vunpack.c.l.b16 %v334
    %v947 = vunpack.c.h.b16 %v334
    %v948 = vunpack.c.l.b16 %v335
    %v949 = vunpack.c.h.b16 %v335
    %v950 = vunpack.c.l.b16 %v336
    %v951 = vunpack.c.h.b16 %v336
    %v952 = vunpack.c.l.b16 %v337
    %v953 = vunpack.c.h.b16 %v337
    %v954 = vunpack.c.l.b16 %v338
    %v955 = vunpack.c.h.b16 %v338
    %v956 = vunpack.c.l.b16 %v339
    %v957 = vunpack.c.h.b16 %v339
    %v958 = vunpack.c.l.b16 %v340
    %v959 = vunpack.c.h.b16 %v340
    %v960 = vunpack.c.l.b16 %v341
    %v961 = vunpack.c.h.b16 %v341
    %v962 = vunpack.c.l.b16 %v342
    %v963 = vunpack.c.h.b16 %v342
    %v964 = vunpack.c.l.b16 %v343
    %v965 = vunpack.c.h.b16 %v343
    %v966 = vunpack.c.l.b16 %v344
    %v967 = vunpack.c.h.b16 %v344
    %v968 = vunpack.c.l.b16 %v345
    %v969 = vunpack.c.h.b16 %v345
    %v970 = vunpack.c.l.b16 %v346
    %v971 = vunpack.c.h.b16 %v346
    %v972 = vunpack.c.l.b16 %v347
    %v973 = vunpack.c.h.b16 %v347
    %v974 = vunpack.c.l.b16 %v348
    %v975 = vunpack.c.h.b16 %v348
    %v976 = vunpack.c.l.b16 %v349
    %v977 = vunpack.c.h.b16 %v349
    %v978 = vunpack.c.l.b16 %v350
    %v979 = vunpack.c.h.b16 %v350
    %v980 = vunpack.c.l.b16 %v351
    %v981 = vunpack.c.h.b16 %v351
    %v982 = vunpack.c.l.b16 %v352
    %v983 = vunpack.c.h.b16 %v352
    %v984 = vunpack.c.l.b16 %v353
    %v985 = vunpack.c.h.b16 %v353
    %v986 = vunpack.c.l.b16 %v354
    %v987 = vunpack.c.h.b16 %v354
    %v988 = vunpack.c.l.b16 %v355
    %v989 = vunpack.c.h.b16 %v355
    %v990 = vunpack.c.l.b16 %v356
    %v991 = vunpack.c.h.b16 %v356
    %v992 = vunpack.c.l.b16 %v357
    %v993 = vunpack.c.h.b16 %v357
    %v994 = vunpack.c.l.b16 %v358
    %v995 = vunpack.c.h.b16 %v358
    %v996 = vunpack.c.l.b16 %v359
    %v997 = vunpack.c.h.b16 %v359
    %v998 = vunpack.c.l.b16 %v360
    %v999 = vunpack.c.h.b16 %v360
    %v1000 = vunpack.c.l.b16 %v361
    %v1001 = vunpack.c.h.b16 %v361
    %v1002 = vunpack.c.l.b16 %v362
    %v1003 = vunpack.c.h.b16 %v362
    %v1004 = vunpack.c.l.b16 %v363
    %v1005 = vunpack.c.h.b16 %v363
    %v1006 = vunpack.c.l.b16 %v364
    %v1007 = vunpack.c.h.b16 %v364
    %v1008 = vunpack.c.l.b16 %v365
    %v1009 = vunpack.c.h.b16 %v365
    %v1010 = vunpack.c.l.b16 %v366
    %v1011 = vunpack.c.h.b16 %v366
    %v1012 = vunpack.c.l.b16 %v367
    %v1013 = vunpack.c.h.b16 %v367
    %v1014 = vunpack.c.l.b16 %v368
    %v1015 = vunpack.c.h.b16 %v368
    %v1016 = vunpack.c.l.b16 %v369
    %v1017 = vunpack.c.h.b16 %v369
    %v1018 = vunpack.c.l.b16 %v370
    %v1019 = vunpack.c.h.b16 %v370
    %v1020 = vunpack.c.l.b16 %v371
    %v1021 = vunpack.c.h.b16 %v371
    %v1022 = vunpack.c.l.b16 %v372
    %v1023 = vunpack.c.h.b16 %v372
    %v1024 = vunpack.c.l.b16 %v373
    %v1025 = vunpack.c.h.b16 %v373
    %v1026 = vunpack.c.l.b16 %v374
    %v1027 = vunpack.c.h.b16 %v374
    %v1028 = vunpack.c.l.b16 %v375
    %v1029 = vunpack.c.h.b16 %v375
    %v1030 = vunpack.c.l.b16 %v376
    %v1031 = vunpack.c.h.b16 %v376
    %v1032 = vunpack.c.l.b16 %v377
    %v1033 = vunpack.c.h.b16 %v377
    %v1034 = vunpack.c.l.b16 %v378
    %v1035 = vunpack.c.h.b16 %v378
    %v1036 = vunpack.c.l.b16 %v379
    %v1037 = vunpack.c.h.b16 %v379
    %v1038 = vunpack.c.l.b16 %v380
    %v1039 = vunpack.c.h.b16 %v380
    %v1040 = vunpack.c.l.b16 %v381
    %v1041 = vunpack.c.h.b16 %v381
    %v1042 = vunpack.c.l.b16 %v382
    %v1043 = vunpack.c.h.b16 %v382
    %v1044 = vunpack.c.l.b16 %v383
    %v1045 = vunpack.c.h.b16 %v383
    %v1046 = vunpack.c.l.b16 %v384
    %v1047 = vunpack.c.h.b16 %v384
    %v1048 = vunpack.c.l.b16 %v385
    %v1049 = vunpack.c.h.b16 %v385
    %v1050 = vunpack.c.l.b16 %v386
    %v1051 = vunpack.c.h.b16 %v386
    %v1052 = vunpack.c.l.b16 %v387
    %v1053 = vunpack.c.h.b16 %v387
    %v1054 = vunpack.c.l.b16 %v388
    %v1055 = vunpack.c.h.b16 %v388
    %v1056 = vunpack.c.l.b16 %v389
    %v1057 = vunpack.c.h.b16 %v389
    %v1058 = vunpack.c.l.b16 %v390
    %v1059 = vunpack.c.h.b16 %v390
    %v1060 = vunpack.c.l.b16 %v391
    %v1061 = vunpack.c.h.b16 %v391
    %v1062 = vunpack.c.l.b16 %v392
    %v1063 = vunpack.c.h.b16 %v392
    %v1064 = vunpack.c.l.b16 %v393
    %v1065 = vunpack.c.h.b16 %v393
    %v1066 = vunpack.c.l.b16 %v394
    %v1067 = vunpack.c.h.b16 %v394
    %v1068 = vunpack.c.l.b16 %v395
    %v1069 = vunpack.c.h.b16 %v395
    %v1070 = vunpack.c.l.b16 %v396
    %v1071 = vunpack.c.h.b16 %v396
    %v1072 = vunpack.c.l.b16 %v397
    %v1073 = vunpack.c.h.b16 %v397
    %v1074 = vunpack.c.l.b16 %v398
    %v1075 = vunpack.c.h.b16 %v398
    %v1076 = vunpack.c.l.b16 %v399
    %v1077 = vunpack.c.h.b16 %v399
    %v1078 = vunpack.c.l.b16 %v400
    %v1079 = vunpack.c.h.b16 %v400
    %v1080 = vunpack.c.l.b16 %v401
    %v1081 = vunpack.c.h.b16 %v401
    %v1082 = vunpack.c.l.b16 %v402
    %v1083 = vunpack.c.h.b16 %v402
    %v1084 = vunpack.c.l.b16 %v403
    %v1085 = vunpack.c.h.b16 %v403
    %v1086 = vunpack.c.l.b16 %v404
    %v1087 = vunpack.c.h.b16 %v404
    %v1088 = vunpack.c.l.b16 %v405
    %v1089 = vunpack.c.h.b16 %v405
    %v1090 = vunpack.c.l.b16 %v406
    %v1091 = vunpack.c.h.b16 %v406
    %v1092 = vunpack.c.l.b16 %v407
    %v1093 = vunpack.c.h.b16 %v407
    %v1094 = vunpack.c.l.b16 %v408
    %v1095 = vunpack.c.h.b16 %v408
    %v1096 = vunpack.c.l.b16 %v409
    %v1097 = vunpack.c.h.b16 %v409
    %v1098 = vunpack.c.l.b16 %v410
    %v1099 = vunpack.c.h.b16 %v410
    %v1100 = vunpack.c.l.b16 %v411
    %v1101 = vunpack.c.h.b16 %v411
    %v1102 = vunpack.c.l.b16 %v412
    %v1103 = vunpack.c.h.b16 %v412
    %v1104 = vunpack.c.l.b16 %v413
    %v1105 = vunpack.c.h.b16 %v413
    %v1106 = vunpack.c.l.b16 %v414
    %v1107 = vunpack.c.h.b16 %v414
    %v1108 = vunpack.c.l.b16 %v415
    %v1109 = vunpack.c.h.b16 %v415
    %v1110 = vunpack.c.l.b16 %v416
    %v1111 = vunpack.c.h.b16 %v416
    %v1112 = vunpack.c.l.b16 %v417
    %v1113 = vunpack.c.h.b16 %v417
    %v1114 = vunpack.c.l.b16 %v418
    %v1115 = vunpack.c.h.b16 %v418
    %v1116 = vunpack.c.l.b16 %v419
    %v1117 = vunpack.c.h.b16 %v419
    %v1118 = vunpack.c.l.b16 %v420
    %v1119 = vunpack.c.h.b16 %v420
    %v1120 = vunpack.c.l.b16 %v421
    %v1121 = vunpack.c.h.b16 %v421
    %v1122 = vunpack.c.l.b16 %v422
    %v1123 = vunpack.c.h.b16 %v422
    %v1124 = vunpack.c.l.b16 %v423
    %v1125 = vunpack.c.h.b16 %v423
    %v1126 = vunpack.c.l.b16 %v424
    %v1127 = vunpack.c.h.b16 %v424
    %v1128 = vunpack.c.l.b16 %v425
    %v1129 = vunpack.c.h.b16 %v425
    %v1130 = vunpack.c.l.b16 %v426
    %v1131 = vunpack.c.h.b16 %v426
    %v1132 = vunpack.c.l.b16 %v427
    %v1133 = vunpack.c.h.b16 %v427
    %v1134 = vunpack.c.l.b16 %v428
    %v1135 = vunpack.c.h.b16 %v428
    %v1136 = vunpack.c.l.b16 %v429
    %v1137 = vunpack.c.h.b16 %v429
    %v1138 = vunpack.c.l.b16 %v430
    %v1139 = vunpack.c.h.b16 %v430
    %v1140 = vunpack.c.l.b16 %v431
    %v1141 = vunpack.c.h.b16 %v431
    %v1142 = vunpack.c.l.b16 %v432
    %v1143 = vunpack.c.h.b16 %v432
    %v1144 = vunpack.c.l.b16 %v433
    %v1145 = vunpack.c.h.b16 %v433
    %v1146 = vunpack.c.l.b16 %v434
    %v1147 = vunpack.c.h.b16 %v434
    %v1148 = vunpack.c.l.b16 %v435
    %v1149 = vunpack.c.h.b16 %v435
    %v1150 = vunpack.c.l.b16 %v436
    %v1151 = vunpack.c.h.b16 %v436
    %v1152 = vunpack.c.l.b16 %v437
    %v1153 = vunpack.c.h.b16 %v437
    %v1154 = vunpack.c.l.b16 %v438
    %v1155 = vunpack.c.h.b16 %v438
    %v1156 = vunpack.c.l.b16 %v439
    %v1157 = vunpack.c.h.b16 %v439
    %v1158 = vunpack.c.l.b16 %v440
    %v1159 = vunpack.c.h.b16 %v440
    %v1160 = vunpack.c.l.b16 %v441
    %v1161 = vunpack.c.h.b16 %v441
    %v1162 = vunpack.c.l.b16 %v442
    %v1163 = vunpack.c.h.b16 %v442
    %v1164 = vunpack.c.l.b16 %v443
    %v1165 = vunpack.c.h.b16 %v443
    %v1166 = vunpack.c.l.b16 %v444
    %v1167 = vunpack.c.h.b16 %v444
    %v1168 = vunpack.c.l.b16 %v445
    %v1169 = vunpack.c.h.b16 %v445
    %v1170 = vunpack.c.l.b16 %v446
    %v1171 = vunpack.c.h.b16 %v446
    %v1172 = vunpack.c.l.b16 %v447
    %v1173 = vunpack.c.h.b16 %v447
    %v1174 = vunpack.c.l.b16 %v448
    %v1175 = vunpack.c.h.b16 %v448
    %v1176 = vunpack.c.l.b16 %v449
    %v1177 = vunpack.c.h.b16 %v449
    %v1178 = vunpack.c.l.b16 %v450
    %v1179 = vunpack.c.h.b16 %v450
    %v1180 = vunpack.c.l.b16 %v451
    %v1181 = vunpack.c.h.b16 %v451
    %v1182 = vunpack.c.l.b16 %v452
    %v1183 = vunpack.c.h.b16 %v452
    %v1184 = vunpack.c.l.b16 %v453
    %v1185 = vunpack.c.h.b16 %v453
    %v1186 = vunpack.c.l.b16 %v454
    %v1187 = vunpack.c.h.b16 %v454
    %v1188 = vunpack.c.l.b16 %v455
    %v1189 = vunpack.c.h.b16 %v455
    %v1190 = vunpack.c.l.b16 %v456
    %v1191 = vunpack.c.h.b16 %v456
    %v1192 = vunpack.c.l.b16 %v457
    %v1193 = vunpack.c.h.b16 %v457
    %v1194 = vunpack.c.l.b16 %v458
    %v1195 = vunpack.c.h.b16 %v458
    %v1196 = vunpack.c.l.b16 %v459
    %v1197 = vunpack.c.h.b16 %v459
    %v1198 = vunpack.c.l.b16 %v460
    %v1199 = vunpack.c.h.b16 %v460
    %v1200 = vunpack.c.l.b16 %v461
    %v1201 = vunpack.c.h.b16 %v461
    %v1202 = vunpack.c.l.b16 %v462
    %v1203 = vunpack.c.h.b16 %v462
    %v1204 = vunpack.c.l.b16 %v463
    %v1205 = vunpack.c.h.b16 %v463
    %v1206 = vunpack.c.l.b16 %v464
    %v1207 = vunpack.c.h.b16 %v464
    %v1208 = vunpack.c.l.b16 %v465
    %v1209 = vunpack.c.h.b16 %v465
    %v1210 = vunpack.c.l.b16 %v466
    %v1211 = vunpack.c.h.b16 %v466
    %v1212 = vunpack.c.l.b16 %v467
    %v1213 = vunpack.c.h.b16 %v467
    %v1214 = vunpack.c.l.b16 %v468
    %v1215 = vunpack.c.h.b16 %v468
    %v1216 = vunpack.c.l.b16 %v469
    %v1217 = vunpack.c.h.b16 %v469
    %v1218 = vunpack.c.l.b16 %v470
    %v1219 = vunpack.c.h.b16 %v470
    %v1220 = vunpack.c.l.b16 %v471
    %v1221 = vunpack.c.h.b16 %v471
    %v1222 = vunpack.c.l.b16 %v472
    %v1223 = vunpack.c.h.b16 %v472
    %v1224 = vunpack.c.l.b16 %v473
    %v1225 = vunpack.c.h.b16 %v473
    %v1226 = vunpack.c.l.b16 %v474
    %v1227 = vunpack.c.h.b16 %v474
    %v1228 = vunpack.c.l.b16 %v475
    %v1229 = vunpack.c.h.b16 %v475
    %v1230 = vunpack.c.l.b16 %v476
    %v1231 = vunpack.c.h.b16 %v476
    %v1232 = vunpack.c.l.b16 %v477
    %v1233 = vunpack.c.h.b16 %v477
    %v1234 = vunpack.c.l.b16 %v478
    %v1235 = vunpack.c.h.b16 %v478
    %v1236 = vunpack.c.l.b16 %v479
    %v1237 = vunpack.c.h.b16 %v479
    %v1238 = vunpack.c.l.b16 %v480
    %v1239 = vunpack.c.h.b16 %v480
    %v1240 = vunpack.c.l.b16 %v481
    %v1241 = vunpack.c.h.b16 %v481
    %v1242 = vunpack.c.l.b16 %v482
    %v1243 = vunpack.c.h.b16 %v482
    %v1244 = vunpack.c.l.b16 %v483
    %v1245 = vunpack.c.h.b16 %v483
    %v1246 = vunpack.c.l.b16 %v484
    %v1247 = vunpack.c.h.b16 %v484
    %v1248 = vunpack.c.l.b16 %v485
    %v1249 = vunpack.c.h.b16 %v485
    %v1250 = vunpack.c.l.b16 %v486
    %v1251 = vunpack.c.h.b16 %v486
    %v1252 = vunpack.c.l.b16 %v487
    %v1253 = vunpack.c.h.b16 %v487
    %v1254 = vunpack.c.l.b16 %v488
    %v1255 = vunpack.c.h.b16 %v488
    %v1256 = vunpack.c.l.b16 %v489
    %v1257 = vunpack.c.h.b16 %v489
    %v1258 = vpack.c.b16 %v750, %v746
    %v1259 = vpack.c.b16 %v751, %v747
    %v1260 = vpack.c.b16 %v752, %v748
    %v1261 = vpack.c.b16 %v753, %v749
    %v1262 = vpack.c.b16 %v758, %v754
    %v1263 = vpack.c.b16 %v759, %v755
    %v1264 = vpack.c.b16 %v760, %v756
    %v1265 = vpack.c.b16 %v761, %v757
    %v1266 = vpack.c.b16 %v766, %v762
    %v1267 = vpack.c.b16 %v767, %v763
    %v1268 = vpack.c.b16 %v768, %v764
    %v1269 = vpack.c.b16 %v769, %v765
    %v1270 = vpack.c.b16 %v774, %v770
    %v1271 = vpack.c.b16 %v775, %v771
    %v1272 = vpack.c.b16 %v776, %v772
    %v1273 = vpack.c.b16 %v777, %v773
    %v1274 = vpack.c.b16 %v782, %v778
    %v1275 = vpack.c.b16 %v783, %v779
    %v1276 = vpack.c.b16 %v784, %v780
    %v1277 = vpack.c.b16 %v785, %v781
    %v1278 = vpack.c.b16 %v790, %v786
    %v1279 = vpack.c.b16 %v791, %v787
    %v1280 = vpack.c.b16 %v792, %v788
    %v1281 = vpack.c.b16 %v793, %v789
    %v1282 = vpack.c.b16 %v798, %v794
    %v1283 = vpack.c.b16 %v799, %v795
    %v1284 = vpack.c.b16 %v800, %v796
    %v1285 = vpack.c.b16 %v801, %v797
    %v1286 = vpack.c.b16 %v806, %v802
    %v1287 = vpack.c.b16 %v807, %v803
    %v1288 = vpack.c.b16 %v808, %v804
    %v1289 = vpack.c.b16 %v809, %v805
    %v1290 = vpack.c.b16 %v814, %v810
    %v1291 = vpack.c.b16 %v815, %v811
    %v1292 = vpack.c.b16 %v816, %v812
    %v1293 = vpack.c.b16 %v817, %v813
    %v1294 = vpack.c.b16 %v822, %v818
    %v1295 = vpack.c.b16 %v823, %v819
    %v1296 = vpack.c.b16 %v824, %v820
    %v1297 = vpack.c.b16 %v825, %v821
    %v1298 = vpack.c.b16 %v830, %v826
    %v1299 = vpack.c.b16 %v831, %v827
    %v1300 = vpack.c.b16 %v832, %v828
    %v1301 = vpack.c.b16 %v833, %v829
    %v1302 = vpack.c.b16 %v838, %v834
    %v1303 = vpack.c.b16 %v839, %v835
    %v1304 = vpack.c.b16 %v840, %v836
    %v1305 = vpack.c.b16 %v841, %v837
    %v1306 = vpack.c.b16 %v846, %v842
    %v1307 = vpack.c.b16 %v847, %v843
    %v1308 = vpack.c.b16 %v848, %v844
    %v1309 = vpack.c.b16 %v849, %v845
    %v1310 = vpack.c.b16 %v854, %v850
    %v1311 = vpack.c.b16 %v855, %v851
    %v1312 = vpack.c.b16 %v856, %v852
    %v1313 = vpack.c.b16 %v857, %v853
    %v1314 = vpack.c.b16 %v862, %v858
    %v1315 = vpack.c.b16 %v863, %v859
    %v1316 = vpack.c.b16 %v864, %v860
    %v1317 = vpack.c.b16 %v865, %v861
    %v1318 = vpack.c.b16 %v870, %v866
    %v1319 = vpack.c.b16 %v871, %v867
    %v1320 = vpack.c.b16 %v872, %v868
    %v1321 = vpack.c.b16 %v873, %v869
    %v1322 = vpack.c.b16 %v878, %v874
    %v1323 = vpack.c.b16 %v879, %v875
    %v1324 = vpack.c.b16 %v880, %v876
    %v1325 = vpack.c.b16 %v881, %v877
    %v1326 = vpack.c.b16 %v886, %v882
    %v1327 = vpack.c.b16 %v887, %v883
    %v1328 = vpack.c.b16 %v888, %v884
    %v1329 = vpack.c.b16 %v889, %v885
    %v1330 = vpack.c.b16 %v894, %v890
    %v1331 = vpack.c.b16 %v895, %v891
    %v1332 = vpack.c.b16 %v896, %v892
    %v1333 = vpack.c.b16 %v897, %v893
    %v1334 = vpack.c.b16 %v902, %v898
    %v1335 = vpack.c.b16 %v903, %v899
    %v1336 = vpack.c.b16 %v904, %v900
    %v1337 = vpack.c.b16 %v905, %v901
    %v1338 = vpack.c.b16 %v910, %v906
    %v1339 = vpack.c.b16 %v911, %v907
    %v1340 = vpack.c.b16 %v912, %v908
    %v1341 = vpack.c.b16 %v913, %v909
    %v1342 = vpack.c.b16 %v918, %v914
    %v1343 = vpack.c.b16 %v919, %v915
    %v1344 = vpack.c.b16 %v920, %v916
    %v1345 = vpack.c.b16 %v921, %v917
    %v1346 = vpack.c.b16 %v926, %v922
    %v1347 = vpack.c.b16 %v927, %v923
    %v1348 = vpack.c.b16 %v928, %v924
    %v1349 = vpack.c.b16 %v929, %v925
    %v1350 = vpack.c.b16 %v934, %v930
    %v1351 = vpack.c.b16 %v935, %v931
    %v1352 = vpack.c.b16 %v936, %v932
    %v1353 = vpack.c.b16 %v937, %v933
    %v1354 = vpack.c.b16 %v942, %v938
    %v1355 = vpack.c.b16 %v943, %v939
    %v1356 = vpack.c.b16 %v944, %v940
    %v1357 = vpack.c.b16 %v945, %v941
    %v1358 = vpack.c.b16 %v950, %v946
    %v1359 = vpack.c.b16 %v951, %v947
    %v1360 = vpack.c.b16 %v952, %v948
    %v1361 = vpack.c.b16 %v953, %v949
    %v1362 = vpack.c.b16 %v958, %v954
    %v1363 = vpack.c.b16 %v959, %v955
    %v1364 = vpack.c.b16 %v960, %v956
    %v1365 = vpack.c.b16 %v961, %v957
    %v1366 = vpack.c.b16 %v966, %v962
    %v1367 = vpack.c.b16 %v967, %v963
    %v1368 = vpack.c.b16 %v968, %v964
    %v1369 = vpack.c.b16 %v969, %v965
    %v1370 = vpack.c.b16 %v974, %v970
    %v1371 = vpack.c.b16 %v975, %v971
    %v1372 = vpack.c.b16 %v976, %v972
    %v1373 = vpack.c.b16 %v977, %v973
    %v1374 = vpack.c.b16 %v982, %v978
    %v1375 = vpack.c.b16 %v983, %v979
    %v1376 = vpack.c.b16 %v984, %v980
    %v1377 = vpack.c.b16 %v985, %v981
    %v1378 = vpack.c.b16 %v990, %v986
    %v1379 = vpack.c.b16 %v991, %v987
    %v1380 = vpack.c.b16 %v992, %v988
    %v1381 = vpack.c.b16 %v993, %v989
    %v1382 = vpack.c.b16 %v998, %v994
    %v1383 = vpack.c.b16 %v999, %v995
    %v1384 = vpack.c.b16 %v1000, %v996
    %v1385 = vpack.c.b16 %v1001, %v997
    %v1386 = vpack.c.b16 %v1006, %v1002
    %v1387 = vpack.c.b16 %v1007, %v1003
    %v1388 = vpack.c.b16 %v1008, %v1004
    %v1389 = vpack.c.b16 %v1009, %v1005
    %v1390 = vpack.c.b16 %v1014, %v1010
    %v1391 = vpack.c.b16 %v1015, %v1011
    %v1392 = vpack.c.b16 %v1016, %v1012
    %v1393 = vpack.c.b16 %v1017, %v1013
    %v1394 = vpack.c.b16 %v1022, %v1018
    %v1395 = vpack.c.b16 %v1023, %v1019
    %v1396 = vpack.c.b16 %v1024, %v1020
    %v1397 = vpack.c.b16 %v1025, %v1021
    %v1398 = vpack.c.b16 %v1030, %v1026
    %v1399 = vpack.c.b16 %v1031, %v1027
    %v1400 = vpack.c.b16 %v1032, %v1028
    %v1401 = vpack.c.b16 %v1033, %v1029
    %v1402 = vpack.c.b16 %v1038, %v1034
    %v1403 = vpack.c.b16 %v1039, %v1035
    %v1404 = vpack.c.b16 %v1040, %v1036
    %v1405 = vpack.c.b16 %v1041, %v1037
    %v1406 = vpack.c.b16 %v1046, %v1042
    %v1407 = vpack.c.b16 %v1047, %v1043
    %v1408 = vpack.c.b16 %v1048, %v1044
    %v1409 = vpack.c.b16 %v1049, %v1045
    %v1410 = vpack.c.b16 %v1054, %v1050
    %v1411 = vpack.c.b16 %v1055, %v1051
    %v1412 = vpack.c.b16 %v1056, %v1052
    %v1413 = vpack.c.b16 %v1057, %v1053
    %v1414 = vpack.c.b16 %v1062, %v1058
    %v1415 = vpack.c.b16 %v1063, %v1059
    %v1416 = vpack.c.b16 %v1064, %v1060
    %v1417 = vpack.c.b16 %v1065, %v1061
    %v1418 = vpack.c.b16 %v1070, %v1066
    %v1419 = vpack.c.b16 %v1071, %v1067
    %v1420 = vpack.c.b16 %v1072, %v1068
    %v1421 = vpack.c.b16 %v1073, %v1069
    %v1422 = vpack.c.b16 %v1078, %v1074
    %v1423 = vpack.c.b16 %v1079, %v1075
    %v1424 = vpack.c.b16 %v1080, %v1076
    %v1425 = vpack.c.b16 %v1081, %v1077
    %v1426 = vpack.c.b16 %v1086, %v1082
    %v1427 = vpack.c.b16 %v1087, %v1083
    %v1428 = vpack.c.b16 %v1088, %v1084
    %v1429 = vpack.c.b16 %v1089, %v1085
    %v1430 = vpack.c.b16 %v1094, %v1090
    %v1431 = vpack.c.b16 %v1095, %v1091
    %v1432 = vpack.c.b16 %v1096, %v1092
    %v1433 = vpack.c.b16 %v1097, %v1093
    %v1434 = vpack.c.b16 %v1102, %v1098
    %v1435 = vpack.c.b16 %v1103, %v1099
    %v1436 = vpack.c.b16 %v1104, %v1100
    %v1437 = vpack.c.b16 %v1105, %v1101
    %v1438 = vpack.c.b16 %v1110, %v1106
    %v1439 = vpack.c.b16 %v1111, %v1107
    %v1440 = vpack.c.b16 %v1112, %v1108
    %v1441 = vpack.c.b16 %v1113, %v1109
    %v1442 = vpack.c.b16 %v1118, %v1114
    %v1443 = vpack.c.b16 %v1119, %v1115
    %v1444 = vpack.c.b16 %v1120, %v1116
    %v1445 = vpack.c.b16 %v1121, %v1117
    %v1446 = vpack.c.b16 %v1126, %v1122
    %v1447 = vpack.c.b16 %v1127, %v1123
    %v1448 = vpack.c.b16 %v1128, %v1124
    %v1449 = vpack.c.b16 %v1129, %v1125
    %v1450 = vpack.c.b16 %v1134, %v1130
    %v1451 = vpack.c.b16 %v1135, %v1131
    %v1452 = vpack.c.b16 %v1136, %v1132
    %v1453 = vpack.c.b16 %v1137, %v1133
    %v1454 = vpack.c.b16 %v1142, %v1138
    %v1455 = vpack.c.b16 %v1143, %v1139
    %v1456 = vpack.c.b16 %v1144, %v1140
    %v1457 = vpack.c.b16 %v1145, %v1141
    %v1458 = vpack.c.b16 %v1150, %v1146
    %v1459 = vpack.c.b16 %v1151, %v1147
    %v1460 = vpack.c.b16 %v1152, %v1148
    %v1461 = vpack.c.b16 %v1153, %v1149
    %v1462 = vpack.c.b16 %v1158, %v1154
    %v1463 = vpack.c.b16 %v1159, %v1155
    %v1464 = vpack.c.b16 %v1160, %v1156
    %v1465 = vpack.c.b16 %v1161, %v1157
    %v1466 = vpack.c.b16 %v1166, %v1162
    %v1467 = vpack.c.b16 %v1167, %v1163
    %v1468 = vpack.c.b16 %v1168, %v1164
    %v1469 = vpack.c.b16 %v1169, %v1165
    %v1470 = vpack.c.b16 %v1174, %v1170
    %v1471 = vpack.c.b16 %v1175, %v1171
    %v1472 = vpack.c.b16 %v1176, %v1172
    %v1473 = vpack.c.b16 %v1177, %v1173
    %v1474 = vpack.c.b16 %v1182, %v1178
    %v1475 = vpack.c.b16 %v1183, %v1179
    %v1476 = vpack.c.b16 %v1184, %v1180
    %v1477 = vpack.c.b16 %v1185, %v1181
    %v1478 = vpack.c.b16 %v1190, %v1186
    %v1479 = vpack.c.b16 %v1191, %v1187
    %v1480 = vpack.c.b16 %v1192, %v1188
    %v1481 = vpack.c.b16 %v1193, %v1189
    %v1482 = vpack.c.b16 %v1198, %v1194
    %v1483 = vpack.c.b16 %v1199, %v1195
    %v1484 = vpack.c.b16 %v1200, %v1196
    %v1485 = vpack.c.b16 %v1201, %v1197
    %v1486 = vpack.c.b16 %v1206, %v1202
    %v1487 = vpack.c.b16 %v1207, %v1203
    %v1488 = vpack.c.b16 %v1208, %v1204
    %v1489 = vpack.c.b16 %v1209, %v1205
    %v1490 = vpack.c.b16 %v1214, %v1210
    %v1491 = vpack.c.b16 %v1215, %v1211
    %v1492 = vpack.c.b16 %v1216, %v1212
    %v1493 = vpack.c.b16 %v1217, %v1213
    %v1494 = vpack.c.b16 %v1222, %v1218
    %v1495 = vpack.c.b16 %v1223, %v1219
    %v1496 = vpack.c.b16 %v1224, %v1220
    %v1497 = vpack.c.b16 %v1225, %v1221
    %v1498 = vpack.c.b16 %v1230, %v1226
    %v1499 = vpack.c.b16 %v1231, %v1227
    %v1500 = vpack.c.b16 %v1232, %v1228
    %v1501 = vpack.c.b16 %v1233, %v1229
    %v1502 = vpack.c.b16 %v1238, %v1234
    %v1503 = vpack.c.b16 %v1239, %v1235
    %v1504 = vpack.c.b16 %v1240, %v1236
    %v1505 = vpack.c.b16 %v1241, %v1237
    %v1506 = vpack.c.b16 %v1246, %v1242
    %v1507 = vpack.c.b16 %v1247, %v1243
    %v1508 = vpack.c.b16 %v1248, %v1244
    %v1509 = vpack.c.b16 %v1249, %v1245
    %v1510 = vpack.c.b16 %v1254, %v1250
    %v1511 = vpack.c.b16 %v1255, %v1251
    %v1512 = vpack.c.b16 %v1256, %v1252
    %v1513 = vpack.c.b16 %v1257, %v1253
    %1770 = vmatprep.subr.bf16.mxu0 %v1287
    %1771 = vmatpush1.bf16.msra.mxu0 %v1286
    %1772 = vmatprep.subr.bf16.mxu0 %v1283
    %1773 = vmatpush1.bf16.msra.mxu0 %v1282
    %1774 = vmatprep.subr.bf16.mxu0 %v1279
    %1775 = vmatpush1.bf16.msra.mxu0 %v1278
    %1776 = vmatprep.subr.bf16.mxu0 %v1275
    %1777 = vmatpush1.bf16.msra.mxu0 %v1274
    %1778 = vmatprep.subr.bf16.mxu0 %v1271
    %1779 = vmatpush1.bf16.msra.mxu0 %v1270
    %1780 = vmatprep.subr.bf16.mxu0 %v1267
    %1781 = vmatpush1.bf16.msra.mxu0 %v1266
    %1782 = vmatprep.subr.bf16.mxu0 %v1263
    %1783 = vmatpush1.bf16.msra.mxu0 %v1262
    %1784 = vmatprep.subr.bf16.mxu0 %v1259
    %1785 = vmatpush1.bf16.msra.mxu0 %v1258
    %1786 = vmatprep.subr.bf16.mxu0 %v1319
    %1787 = vmatpush2.bf16.msra.mxu0 %v1318
    %1788 = vmatprep.subr.bf16.mxu0 %v1315
    %1789 = vmatpush2.bf16.msra.mxu0 %v1314
    %1790 = vmatprep.subr.bf16.mxu0 %v1311
    %1791 = vmatpush2.bf16.msra.mxu0 %v1310
    %1792 = vmatprep.subr.bf16.mxu0 %v1307
    %1793 = vmatpush2.bf16.msra.mxu0 %v1306
    %1794 = vmatprep.subr.bf16.mxu0 %v1303
    %1795 = vmatpush2.bf16.msra.mxu0 %v1302
    %1796 = vmatprep.subr.bf16.mxu0 %v1299
    %1797 = vmatpush2.bf16.msra.mxu0 %v1298
    %1798 = vmatprep.subr.bf16.mxu0 %v1295
    %1799 = vmatpush2.bf16.msra.mxu0 %v1294
    %1800 = vmatprep.subr.bf16.mxu0 %v1291
    %1801 = vmatpush2.bf16.msra.mxu0 %v1290
    %1802 = vmatprep.mubr.bf16.mxu0 %v227
    %1803 = vmatmul.mubr.bf16.gmra.mxu0 %v226
    %v1804 = vpop.f32.mrf.mxu0
    %v1805 = vadd.f32 0.0, %v1804
    %v1806 = vpop.f32.mrf.mxu0
    %v1807 = vadd.f32 0.0, %v1806
    %v1808 = vpop.f32.mrf.mxu0
    %v1809 = vpop.f32.mrf.mxu0
    %1810 = vdwg.mxu0
    %1811 = vmatprep.subr.bf16.mxu0 %v1351
    %1812 = vmatpush1.bf16.msra.mxu0 %v1350
    %1813 = vmatprep.subr.bf16.mxu0 %v1347
    %1814 = vmatpush1.bf16.msra.mxu0 %v1346
    %1815 = vmatprep.subr.bf16.mxu0 %v1343
    %1816 = vmatpush1.bf16.msra.mxu0 %v1342
    %1817 = vmatprep.subr.bf16.mxu0 %v1339
    %1818 = vmatpush1.bf16.msra.mxu0 %v1338
    %1819 = vmatprep.subr.bf16.mxu0 %v1335
    %1820 = vmatpush1.bf16.msra.mxu0 %v1334
    %1821 = vmatprep.subr.bf16.mxu0 %v1331
    %1822 = vmatpush1.bf16.msra.mxu0 %v1330
    %1823 = vmatprep.subr.bf16.mxu0 %v1327
    %1824 = vmatpush1.bf16.msra.mxu0 %v1326
    %1825 = vmatprep.subr.bf16.mxu0 %v1323
    %1826 = vmatpush1.bf16.msra.mxu0 %v1322
    %1827 = vmatprep.subr.bf16.mxu0 %v1383
    %1828 = vmatpush2.bf16.msra.mxu0 %v1382
    %1829 = vmatprep.subr.bf16.mxu0 %v1379
    %1830 = vmatpush2.bf16.msra.mxu0 %v1378
    %1831 = vmatprep.subr.bf16.mxu0 %v1375
    %1832 = vmatpush2.bf16.msra.mxu0 %v1374
    %1833 = vmatprep.subr.bf16.mxu0 %v1371
    %1834 = vmatpush2.bf16.msra.mxu0 %v1370
    %1835 = vmatprep.subr.bf16.mxu0 %v1367
    %1836 = vmatpush2.bf16.msra.mxu0 %v1366
    %1837 = vmatprep.subr.bf16.mxu0 %v1363
    %1838 = vmatpush2.bf16.msra.mxu0 %v1362
    %1839 = vmatprep.subr.bf16.mxu0 %v1359
    %1840 = vmatpush2.bf16.msra.mxu0 %v1358
    %1841 = vmatprep.subr.bf16.mxu0 %v1355
    %1842 = vmatpush2.bf16.msra.mxu0 %v1354
    %1843 = vmatprep.mubr.bf16.mxu0 %v229
    %1844 = vmatmul.mubr.bf16.gmra.mxu0 %v228
    %v1845 = vpop.f32.mrf.mxu0
    %v1846 = vadd.f32 %v1805, %v1845
    %v1847 = vpop.f32.mrf.mxu0
    %v1848 = vadd.f32 %v1807, %v1847
    %v1849 = vpop.f32.mrf.mxu0
    %v1850 = vpop.f32.mrf.mxu0
    %1851 = vdwg.mxu0
    %1852 = vmatprep.subr.bf16.mxu0 %v1415
    %1853 = vmatpush1.bf16.msra.mxu0 %v1414
    %1854 = vmatprep.subr.bf16.mxu0 %v1411
    %1855 = vmatpush1.bf16.msra.mxu0 %v1410
    %1856 = vmatprep.subr.bf16.mxu0 %v1407
    %1857 = vmatpush1.bf16.msra.mxu0 %v1406
    %1858 = vmatprep.subr.bf16.mxu0 %v1403
    %1859 = vmatpush1.bf16.msra.mxu0 %v1402
    %1860 = vmatprep.subr.bf16.mxu0 %v1399
    %1861 = vmatpush1.bf16.msra.mxu0 %v1398
    %1862 = vmatprep.subr.bf16.mxu0 %v1395
    %1863 = vmatpush1.bf16.msra.mxu0 %v1394
    %1864 = vmatprep.subr.bf16.mxu0 %v1391
    %1865 = vmatpush1.bf16.msra.mxu0 %v1390
    %1866 = vmatprep.subr.bf16.mxu0 %v1387
    %1867 = vmatpush1.bf16.msra.mxu0 %v1386
    %1868 = vmatprep.subr.bf16.mxu0 %v1447
    %1869 = vmatpush2.bf16.msra.mxu0 %v1446
    %1870 = vmatprep.subr.bf16.mxu0 %v1443
    %1871 = vmatpush2.bf16.msra.mxu0 %v1442
    %1872 = vmatprep.subr.bf16.mxu0 %v1439
    %1873 = vmatpush2.bf16.msra.mxu0 %v1438
    %1874 = vmatprep.subr.bf16.mxu0 %v1435
    %1875 = vmatpush2.bf16.msra.mxu0 %v1434
    %1876 = vmatprep.subr.bf16.mxu0 %v1431
    %1877 = vmatpush2.bf16.msra.mxu0 %v1430
    %1878 = vmatprep.subr.bf16.mxu0 %v1427
    %1879 = vmatpush2.bf16.msra.mxu0 %v1426
    %1880 = vmatprep.subr.bf16.mxu0 %v1423
    %1881 = vmatpush2.bf16.msra.mxu0 %v1422
    %1882 = vmatprep.subr.bf16.mxu0 %v1419
    %1883 = vmatpush2.bf16.msra.mxu0 %v1418
    %1884 = vmatprep.mubr.bf16.mxu0 %v231
    %1885 = vmatmul.mubr.bf16.gmra.mxu0 %v230
    %v1886 = vpop.f32.mrf.mxu0
    %v1887 = vadd.f32 %v1846, %v1886
    %v1888 = vpop.f32.mrf.mxu0
    %v1889 = vadd.f32 %v1848, %v1888
    %v1890 = vpop.f32.mrf.mxu0
    %v1891 = vpop.f32.mrf.mxu0
    %1892 = vdwg.mxu0
    %1893 = vmatprep.subr.bf16.mxu0 %v1479
    %1894 = vmatpush1.bf16.msra.mxu0 %v1478
    %1895 = vmatprep.subr.bf16.mxu0 %v1475
    %1896 = vmatpush1.bf16.msra.mxu0 %v1474
    %1897 = vmatprep.subr.bf16.mxu0 %v1471
    %1898 = vmatpush1.bf16.msra.mxu0 %v1470
    %1899 = vmatprep.subr.bf16.mxu0 %v1467
    %1900 = vmatpush1.bf16.msra.mxu0 %v1466
    %1901 = vmatprep.subr.bf16.mxu0 %v1463
    %1902 = vmatpush1.bf16.msra.mxu0 %v1462
    %1903 = vmatprep.subr.bf16.mxu0 %v1459
    %1904 = vmatpush1.bf16.msra.mxu0 %v1458
    %1905 = vmatprep.subr.bf16.mxu0 %v1455
    %1906 = vmatpush1.bf16.msra.mxu0 %v1454
    %1907 = vmatprep.subr.bf16.mxu0 %v1451
    %1908 = vmatpush1.bf16.msra.mxu0 %v1450
    %1909 = vmatprep.subr.bf16.mxu0 %v1511
    %1910 = vmatpush2.bf16.msra.mxu0 %v1510
    %1911 = vmatprep.subr.bf16.mxu0 %v1507
    %1912 = vmatpush2.bf16.msra.mxu0 %v1506
    %1913 = vmatprep.subr.bf16.mxu0 %v1503
    %1914 = vmatpush2.bf16.msra.mxu0 %v1502
    %1915 = vmatprep.subr.bf16.mxu0 %v1499
    %1916 = vmatpush2.bf16.msra.mxu0 %v1498
    %1917 = vmatprep.subr.bf16.mxu0 %v1495
    %1918 = vmatpush2.bf16.msra.mxu0 %v1494
    %1919 = vmatprep.subr.bf16.mxu0 %v1491
    %1920 = vmatpush2.bf16.msra.mxu0 %v1490
    %1921 = vmatprep.subr.bf16.mxu0 %v1487
    %1922 = vmatpush2.bf16.msra.mxu0 %v1486
    %1923 = vmatprep.subr.bf16.mxu0 %v1483
    %1924 = vmatpush2.bf16.msra.mxu0 %v1482
    %1925 = vmatprep.mubr.bf16.mxu0 %v233
    %1926 = vmatmul.mubr.bf16.gmra.mxu0 %v232
    %v1927 = vpop.f32.mrf.mxu0
    %v1928 = vadd.f32 %v1887, %v1927
    %v1929 = vpop.f32.mrf.mxu0
    %v1930 = vadd.f32 %v1889, %v1929
    %v1931 = vpop.f32.mrf.mxu0
    %v1932 = vpop.f32.mrf.mxu0
    %1933 = vdwg.mxu0
    %1934 = vmatprep.subr.bf16.mxu0 %v1289
    %1935 = vmatpush1.bf16.msra.mxu0 %v1288
    %1936 = vmatprep.subr.bf16.mxu0 %v1285
    %1937 = vmatpush1.bf16.msra.mxu0 %v1284
    %1938 = vmatprep.subr.bf16.mxu0 %v1281
    %1939 = vmatpush1.bf16.msra.mxu0 %v1280
    %1940 = vmatprep.subr.bf16.mxu0 %v1277
    %1941 = vmatpush1.bf16.msra.mxu0 %v1276
    %1942 = vmatprep.subr.bf16.mxu0 %v1273
    %1943 = vmatpush1.bf16.msra.mxu0 %v1272
    %1944 = vmatprep.subr.bf16.mxu0 %v1269
    %1945 = vmatpush1.bf16.msra.mxu0 %v1268
    %1946 = vmatprep.subr.bf16.mxu0 %v1265
    %1947 = vmatpush1.bf16.msra.mxu0 %v1264
    %1948 = vmatprep.subr.bf16.mxu0 %v1261
    %1949 = vmatpush1.bf16.msra.mxu0 %v1260
    %1950 = vmatprep.subr.bf16.mxu0 %v1321
    %1951 = vmatpush2.bf16.msra.mxu0 %v1320
    %1952 = vmatprep.subr.bf16.mxu0 %v1317
    %1953 = vmatpush2.bf16.msra.mxu0 %v1316
    %1954 = vmatprep.subr.bf16.mxu0 %v1313
    %1955 = vmatpush2.bf16.msra.mxu0 %v1312
    %1956 = vmatprep.subr.bf16.mxu0 %v1309
    %1957 = vmatpush2.bf16.msra.mxu0 %v1308
    %1958 = vmatprep.subr.bf16.mxu0 %v1305
    %1959 = vmatpush2.bf16.msra.mxu0 %v1304
    %1960 = vmatprep.subr.bf16.mxu0 %v1301
    %1961 = vmatpush2.bf16.msra.mxu0 %v1300
    %1962 = vmatprep.subr.bf16.mxu0 %v1297
    %1963 = vmatpush2.bf16.msra.mxu0 %v1296
    %1964 = vmatprep.subr.bf16.mxu0 %v1293
    %1965 = vmatpush2.bf16.msra.mxu0 %v1292
    %1966 = vmatprep.mubr.bf16.mxu0 %v227
    %1967 = vmatmul.mubr.bf16.gmra.mxu0 %v226
    %v1968 = vpop.f32.mrf.mxu0
    %v1969 = vadd.f32 0.0, %v1968
    %v1970 = vpop.f32.mrf.mxu0
    %v1971 = vadd.f32 0.0, %v1970
    %v1972 = vpop.f32.mrf.mxu0
    %v1973 = vpop.f32.mrf.mxu0
    %1974 = vdwg.mxu0
    %1975 = vmatprep.subr.bf16.mxu0 %v1353
    %1976 = vmatpush1.bf16.msra.mxu0 %v1352
    %1977 = vmatprep.subr.bf16.mxu0 %v1349
    %1978 = vmatpush1.bf16.msra.mxu0 %v1348
    %1979 = vmatprep.subr.bf16.mxu0 %v1345
    %1980 = vmatpush1.bf16.msra.mxu0 %v1344
    %1981 = vmatprep.subr.bf16.mxu0 %v1341
    %1982 = vmatpush1.bf16.msra.mxu0 %v1340
    %1983 = vmatprep.subr.bf16.mxu0 %v1337
    %1984 = vmatpush1.bf16.msra.mxu0 %v1336
    %1985 = vmatprep.subr.bf16.mxu0 %v1333
    %1986 = vmatpush1.bf16.msra.mxu0 %v1332
    %1987 = vmatprep.subr.bf16.mxu0 %v1329
    %1988 = vmatpush1.bf16.msra.mxu0 %v1328
    %1989 = vmatprep.subr.bf16.mxu0 %v1325
    %1990 = vmatpush1.bf16.msra.mxu0 %v1324
    %1991 = vmatprep.subr.bf16.mxu0 %v1385
    %1992 = vmatpush2.bf16.msra.mxu0 %v1384
    %1993 = vmatprep.subr.bf16.mxu0 %v1381
    %1994 = vmatpush2.bf16.msra.mxu0 %v1380
    %1995 = vmatprep.subr.bf16.mxu0 %v1377
    %1996 = vmatpush2.bf16.msra.mxu0 %v1376
    %1997 = vmatprep.subr.bf16.mxu0 %v1373
    %1998 = vmatpush2.bf16.msra.mxu0 %v1372
    %1999 = vmatprep.subr.bf16.mxu0 %v1369
    %2000 = vmatpush2.bf16.msra.mxu0 %v1368
    %2001 = vmatprep.subr.bf16.mxu0 %v1365
    %2002 = vmatpush2.bf16.msra.mxu0 %v1364
    %2003 = vmatprep.subr.bf16.mxu0 %v1361
    %2004 = vmatpush2.bf16.msra.mxu0 %v1360
    %2005 = vmatprep.subr.bf16.mxu0 %v1357
    %2006 = vmatpush2.bf16.msra.mxu0 %v1356
    %2007 = vmatprep.mubr.bf16.mxu0 %v229
    %2008 = vmatmul.mubr.bf16.gmra.mxu0 %v228
    %v2009 = vpop.f32.mrf.mxu0
    %v2010 = vadd.f32 %v1969, %v2009
    %v2011 = vpop.f32.mrf.mxu0
    %v2012 = vadd.f32 %v1971, %v2011
    %v2013 = vpop.f32.mrf.mxu0
    %v2014 = vpop.f32.mrf.mxu0
    %2015 = vdwg.mxu0
    %2016 = vmatprep.subr.bf16.mxu0 %v1417
    %2017 = vmatpush1.bf16.msra.mxu0 %v1416
    %2018 = vmatprep.subr.bf16.mxu0 %v1413
    %2019 = vmatpush1.bf16.msra.mxu0 %v1412
    %2020 = vmatprep.subr.bf16.mxu0 %v1409
    %2021 = vmatpush1.bf16.msra.mxu0 %v1408
    %2022 = vmatprep.subr.bf16.mxu0 %v1405
    %2023 = vmatpush1.bf16.msra.mxu0 %v1404
    %2024 = vmatprep.subr.bf16.mxu0 %v1401
    %2025 = vmatpush1.bf16.msra.mxu0 %v1400
    %2026 = vmatprep.subr.bf16.mxu0 %v1397
    %2027 = vmatpush1.bf16.msra.mxu0 %v1396
    %2028 = vmatprep.subr.bf16.mxu0 %v1393
    %2029 = vmatpush1.bf16.msra.mxu0 %v1392
    %2030 = vmatprep.subr.bf16.mxu0 %v1389
    %2031 = vmatpush1.bf16.msra.mxu0 %v1388
    %2032 = vmatprep.subr.bf16.mxu0 %v1449
    %2033 = vmatpush2.bf16.msra.mxu0 %v1448
    %2034 = vmatprep.subr.bf16.mxu0 %v1445
    %2035 = vmatpush2.bf16.msra.mxu0 %v1444
    %2036 = vmatprep.subr.bf16.mxu0 %v1441
    %2037 = vmatpush2.bf16.msra.mxu0 %v1440
    %2038 = vmatprep.subr.bf16.mxu0 %v1437
    %2039 = vmatpush2.bf16.msra.mxu0 %v1436
    %2040 = vmatprep.subr.bf16.mxu0 %v1433
    %2041 = vmatpush2.bf16.msra.mxu0 %v1432
    %2042 = vmatprep.subr.bf16.mxu0 %v1429
    %2043 = vmatpush2.bf16.msra.mxu0 %v1428
    %2044 = vmatprep.subr.bf16.mxu0 %v1425
    %2045 = vmatpush2.bf16.msra.mxu0 %v1424
    %2046 = vmatprep.subr.bf16.mxu0 %v1421
    %2047 = vmatpush2.bf16.msra.mxu0 %v1420
    %2048 = vmatprep.mubr.bf16.mxu0 %v231
    %2049 = vmatmul.mubr.bf16.gmra.mxu0 %v230
    %v2050 = vpop.f32.mrf.mxu0
    %v2051 = vadd.f32 %v2010, %v2050
    %v2052 = vpop.f32.mrf.mxu0
    %v2053 = vadd.f32 %v2012, %v2052
    %v2054 = vpop.f32.mrf.mxu0
    %v2055 = vpop.f32.mrf.mxu0
    %2056 = vdwg.mxu0
    %2057 = vmatprep.subr.bf16.mxu0 %v1481
    %2058 = vmatpush1.bf16.msra.mxu0 %v1480
    %2059 = vmatprep.subr.bf16.mxu0 %v1477
    %2060 = vmatpush1.bf16.msra.mxu0 %v1476
    %2061 = vmatprep.subr.bf16.mxu0 %v1473
    %2062 = vmatpush1.bf16.msra.mxu0 %v1472
    %2063 = vmatprep.subr.bf16.mxu0 %v1469
    %2064 = vmatpush1.bf16.msra.mxu0 %v1468
    %2065 = vmatprep.subr.bf16.mxu0 %v1465
    %2066 = vmatpush1.bf16.msra.mxu0 %v1464
    %2067 = vmatprep.subr.bf16.mxu0 %v1461
    %2068 = vmatpush1.bf16.msra.mxu0 %v1460
    %2069 = vmatprep.subr.bf16.mxu0 %v1457
    %2070 = vmatpush1.bf16.msra.mxu0 %v1456
    %2071 = vmatprep.subr.bf16.mxu0 %v1453
    %2072 = vmatpush1.bf16.msra.mxu0 %v1452
    %2073 = vmatprep.subr.bf16.mxu0 %v1513
    %2074 = vmatpush2.bf16.msra.mxu0 %v1512
    %2075 = vmatprep.subr.bf16.mxu0 %v1509
    %2076 = vmatpush2.bf16.msra.mxu0 %v1508
    %2077 = vmatprep.subr.bf16.mxu0 %v1505
    %2078 = vmatpush2.bf16.msra.mxu0 %v1504
    %2079 = vmatprep.subr.bf16.mxu0 %v1501
    %2080 = vmatpush2.bf16.msra.mxu0 %v1500
    %2081 = vmatprep.subr.bf16.mxu0 %v1497
    %2082 = vmatpush2.bf16.msra.mxu0 %v1496
    %2083 = vmatprep.subr.bf16.mxu0 %v1493
    %2084 = vmatpush2.bf16.msra.mxu0 %v1492
    %2085 = vmatprep.subr.bf16.mxu0 %v1489
    %2086 = vmatpush2.bf16.msra.mxu0 %v1488
    %2087 = vmatprep.subr.bf16.mxu0 %v1485
    %2088 = vmatpush2.bf16.msra.mxu0 %v1484
    %2089 = vmatprep.mubr.bf16.mxu0 %v233
    %2090 = vmatmul.mubr.bf16.gmra.mxu0 %v232
    %v2091 = vpop.f32.mrf.mxu0
    %v2092 = vadd.f32 %v2051, %v2091
    %v2093 = vpop.f32.mrf.mxu0
    %v2094 = vadd.f32 %v2053, %v2093
    %v2095 = vpop.f32.mrf.mxu0
    %v2096 = vpop.f32.mrf.mxu0
    %2097 = vdwg.mxu0
    %vm2098 = vcmask 1041408
    %v2099 = vsel %vm2098, %v1928, 0.0
    %v2100 = vsel %vm2098, %v1930, 0.0
    %v2101 = vadd.f32 %v2099, %v2100
    %v2102 = vsel %vm2098, %v2092, 0.0
    %v2103 = vadd.f32 %v2101, %v2102
    %v2104 = vsel %vm2098, %v2094, 0.0
    %v2105 = vadd.f32 %v2103, %v2104
    %2106 = vadd.xlane.f32.xlu0 %v2105
    %v2107 = vpop.xlane.xlu0 %2106
    %v2108 = vmul.f32 %v2107, 0.001953125
    %v2109 = vmul.f32 %v1928, %v1928
    %v2110 = vmul.f32 %v1930, %v1930
    %v2111 = vmul.f32 %v2092, %v2092
    %v2112 = vmul.f32 %v2094, %v2094
    %v2113 = vsel %vm2098, %v2109, 0.0
    %v2114 = vsel %vm2098, %v2110, 0.0
    %v2115 = vadd.f32 %v2113, %v2114
    %v2116 = vsel %vm2098, %v2111, 0.0
    %v2117 = vadd.f32 %v2115, %v2116
    %v2118 = vsel %vm2098, %v2112, 0.0
    %v2119 = vadd.f32 %v2117, %v2118
    %2120 = vadd.xlane.f32.xlu0 %v2119
    %v2121 = vpop.xlane.xlu0 %2120
    %v2122 = vmul.f32 %v2121, 0.001953125
    %v2123 = vmul.f32 %v2108, %v2108
    %v2124 = vsub.f32 %v2122, %v2123
    %v2125 = vsub.f32 %v1928, %v2108
    %v2126 = vsub.f32 %v1930, %v2108
    %v2127 = vsub.f32 %v2092, %v2108
    %v2128 = vsub.f32 %v2094, %v2108
    %v2129 = vadd.f32 %v2124, 1e-05
    %v2130 = vrsqrt.pop %v2129
    %v2131 = vmul.f32 %v2125, %v2130
    %v2132 = vmul.f32 %v2126, %v2130
    %v2133 = vmul.f32 %v2127, %v2130
    %v2134 = vmul.f32 %v2128, %v2130
    %s2135 = sld [smem:[#allocation8]]
    %v2136 = vstv %s2135
    %v2137 = vmul.f32 %v2131, %v2136
    %v2138 = vmul.f32 %v2132, %v2136
    %v2139 = vmul.f32 %v2133, %v2136
    %v2140 = vmul.f32 %v2134, %v2136
    %s2141 = sld [smem:[#allocation8 + $0x1]]
    %v2142 = vstv %s2141
    %v2143 = vadd.f32 %v2137, %v2142
    %v2144 = vadd.f32 %v2138, %v2142
    %v2145 = vadd.f32 %v2139, %v2142
    %v2146 = vadd.f32 %v2140, %v2142
    %v2147 = vxor.u32 %v2143, 2147483648
    %v2148 = vxor.u32 %v2144, 2147483648
    %v2149 = vxor.u32 %v2145, 2147483648
    %v2150 = vxor.u32 %v2146, 2147483648
    %v2151 = vmul.f32 %v2147, 1.442695
    %v2152 = vpow.pop %v2151
    %v2153 = vmul.f32 %v2148, 1.442695
    %v2154 = vpow.pop %v2153
    %v2155 = vmul.f32 %v2149, 1.442695
    %v2156 = vpow.pop %v2155
    %v2157 = vmul.f32 %v2150, 1.442695
    %v2158 = vpow.pop %v2157
    %v2159 = vadd.f32 %v2152, 1.0
    %v2160 = vadd.f32 %v2154, 1.0
    %v2161 = vadd.f32 %v2156, 1.0
    %v2162 = vadd.f32 %v2158, 1.0
    %v2163 = vrcp.pop %v2159
    %v2164 = vmul.f32 1.0, %v2163
    %v2165 = vrcp.pop %v2160
    %v2166 = vmul.f32 1.0, %v2165
    %v2167 = vrcp.pop %v2161
    %v2168 = vmul.f32 1.0, %v2167
    %v2169 = vrcp.pop %v2162
    %v2170 = vmul.f32 1.0, %v2169
    %v2175 = vcombine.low %v2164, %v2166
    %v2176 = vcombine.low %v2168, %v2170
    %v2178 = vunpack.c.l.s4 1966171168
    %v2179 = vunpack.c.0.s8 %v2178
    %v2180 = vlaneseq
    %v2181 = vshrl.u32 %v2180, 7
    %v2182 = vsub.s32 %v2179, %v2181
    %v2183 = vrot.slane %v2175, %v2182
    %v2185 = vunpack.c.l.s4 1966171168
    %v2186 = vunpack.c.0.s8 %v2185
    %v2187 = vlaneseq
    %v2188 = vshrl.u32 %v2187, 7
    %v2189 = vsub.s32 %v2186, %v2188
    %v2190 = vrot.slane %v2176, %v2189
    %v2191 = vcombine.low %v2183, %v2190
    %v2192 = vcombine.high %v2183, %v2190
    %v2194 = vunpack.c.l.s4 1966171168
    %v2195 = vunpack.c.0.s8 %v2194
    %v2196 = vlaneseq
    %v2197 = vshrl.u32 %v2196, 7
    %v2198 = vsub.s32 %v2195, %v2197
    %v2199 = vrot.slane %v2191, %v2198
    %v2201 = vunpack.c.l.s4 1966171168
    %v2202 = vunpack.c.0.s8 %v2201
    %v2203 = vlaneseq
    %v2204 = vshrl.u32 %v2203, 7
    %v2205 = vsub.s32 %v2202, %v2204
    %v2206 = vrot.slane %v2192, %v2205
    %v2207 = vlaneseq
    %v2208 = vshrl.u32 %v2207, 7
    %v2209 = vsub.s32 0, %v2208
    %v2210 = vrot.slane %v2199, %v2209
    %v2211 = vlaneseq
    %v2212 = vshrl.u32 %v2211, 7
    %v2213 = vsub.s32 1, %v2212
    %v2214 = vrot.slane %v2199, %v2213
    %v2215 = vlaneseq
    %v2216 = vshrl.u32 %v2215, 7
    %v2217 = vsub.s32 2, %v2216
    %v2218 = vrot.slane %v2199, %v2217
    %v2219 = vlaneseq
    %v2220 = vshrl.u32 %v2219, 7
    %v2221 = vsub.s32 3, %v2220
    %v2222 = vrot.slane %v2199, %v2221
    %v2223 = vlaneseq
    %v2224 = vshrl.u32 %v2223, 7
    %v2225 = vsub.s32 0, %v2224
    %v2226 = vrot.slane %v2206, %v2225
    %v2227 = vlaneseq
    %v2228 = vshrl.u32 %v2227, 7
    %v2229 = vsub.s32 1, %v2228
    %v2230 = vrot.slane %v2206, %v2229
    %v2231 = vlaneseq
    %v2232 = vshrl.u32 %v2231, 7
    %v2233 = vsub.s32 2, %v2232
    %v2234 = vrot.slane %v2206, %v2233
    %v2235 = vlaneseq
    %v2236 = vshrl.u32 %v2235, 7
    %v2237 = vsub.s32 3, %v2236
    %v2238 = vrot.slane %v2206, %v2237
    %v2239 = vcombine.low %v2210, %v2214
    %v2240 = vcombine.low %v2218, %v2222
    %v2241 = vcombine.low %v2226, %v2230
    %v2242 = vcombine.low %v2234, %v2238
    %v2247 = vmul.f32 %v56, %v2239
    %v2248 = vmul.f32 %v57, %v2240
    %v2249 = vmul.f32 %v58, %v2241
    %v2250 = vmul.f32 %v59, %v2242
    %2251 = vst [vmem:[#allocation9] sm:$0xff] %v2247
    %2252 = vst [vmem:[#allocation9 + $0x8] sm:$0xff] %v2248
    %2253 = vst [vmem:[#allocation9 + $0x10] sm:$0xff] %v2249
    %2254 = vst [vmem:[#allocation9 + $0x18] sm:$0xff] %v2250
    // Predicated region
    $region26: #{tpu_custom_call.1} parent=1 // pred_check
      _
    $region27: #{tpu_custom_call.1} parent=1 // pred_check_branch
      %2256 = sbr.rel (0) target = $region29
    $region28: #{tpu_custom_call.1} parent=1 // pred_region
      %s2258 = ssub.s32 512, 512
      %2259 = vsyncadd [#allocation4], %s2258
      %s2260 = sshll.u32 [#allocation9], 4
      %s2261 = int_to_ptr.vmem [resolvable:$true] %s2260
      %2266 = dma.vmem_to_hbm [thread:$0]  %s2261, 512, %s3, [#allocation4], 256, 256, 16
    $region29: #{tpu_custom_call.1} parent=1 // pred_fallthru
      _
    // Predicated region
    $region30: #{tpu_custom_call.1} parent=1 // pred_check
      _
    $region31: #{tpu_custom_call.1} parent=1 // pred_check_branch
      %2268 = sbr.rel (0) target = $region33
    $region32: #{tpu_custom_call.1} parent=1 // pred_region
      %2269 = dma.done [#allocation4], 512
    $region33: #{tpu_custom_call.1} parent=1 // pred_fallthru
      _
    %2270 = vsyncpa [#allocation3], 1
    %2271 = vsyncpa [#allocation7], 1
    %2272 = vsyncpa [#allocation4], 1
    %2273 = vsyncpa [#allocation5], 1

</llo_original>
